<compile_context>
chip_gen: v7x
topology: tpu7x:2x2x1
jax: 0.10.0
libtpu: 0.0.40
codegen_flags: <defaults>
</compile_context>

<pallas_src>
import functools

import jax
import jax.numpy as jnp
from jax.experimental import pallas as pl
from jax.experimental.pallas import tpu as pltpu


def autoencoder_kernel(x_ref,
                       w1_ref, b1_ref,
                       w2_ref, b2_ref,
                       w3_ref, b3_ref,
                       w4_ref, b4_ref,
                       enc_ref, dec_ref):
    f32 = jnp.float32
    cdt = w1_ref.dtype  # bf16 compute dtype for MXU operands

    # x arrives in its stored dtype (f32); cast once here so the wrapper never
    # writes a separate bf16 copy of the whole batch to HBM.
    x = x_ref[...].astype(cdt)

    # Encoder: bf16 operands on the MXU, f32 accumulation.  Biases are f32 so
    # the adds need no convert; intermediates drop to bf16 right after ReLU.
    h1 = jnp.maximum(
        jnp.dot(x, w1_ref[...], preferred_element_type=f32) + b1_ref[...],
        0.0).astype(cdt)
    enc = jnp.maximum(
        jnp.dot(h1, w2_ref[...], preferred_element_type=f32) + b2_ref[...],
        0.0).astype(cdt)

    # Decoder.
    h2 = jnp.maximum(
        jnp.dot(enc, w3_ref[...], preferred_element_type=f32) + b3_ref[...],
        0.0).astype(cdt)
    dec = jnp.maximum(
        jnp.dot(h2, w4_ref[...], preferred_element_type=f32) + b4_ref[...],
        0.0).astype(cdt)

    enc_ref[...] = enc.astype(enc_ref.dtype)
    dec_ref[...] = dec.astype(dec_ref.dtype)


def _round_up(x, m):
    return ((x + m - 1) // m) * m


def _tensorcores_per_chip():
    """Best-effort TensorCores-per-chip query; defaults to 1 (v5e/v6e-safe)."""
    try:
        info = pltpu.get_tpu_info()
    except Exception:
        return 1
    for name in ("tensorcore_count", "num_tensorcores", "num_cores",
                 "cores_per_chip", "core_count"):
        n = getattr(info, name, None)
        if isinstance(n, int) and 0 < n <= 8:
            return n
    return 1


def _default_block_b(B):
    # bf16 packs 16 rows per sublane group -> 16-row granularity.  Cap at 1024
    # rows: per-step working set is ~6-10 MiB, far under scoped VMEM on every
    # generation (including v7x's 64 MiB physical / 32 MiB scoped default).
    b16 = _round_up(max(B, 1), 16)
    block_b = min(1024, b16)
    # Split across TensorCores (v7x megacore) only when every core's tile is
    # itself >=128 rows; on single-TC v5e/v6e one big tile is strictly better.
    n_tc = _tensorcores_per_chip()
    if n_tc >= 2 and b16 // block_b < n_tc and b16 >= n_tc * 128:
        block_b = _round_up(pl.cdiv(b16, n_tc), 16)
    return max(16, block_b)


@functools.partial(jax.jit, static_argnames=("block_b", "compute_dtype"))
def _autoencoder_impl(x, params, block_b, compute_dtype):
    w1, b1, w2, b2, w3, b3, w4, b4 = params
    # Weights feed the MXU in bf16; biases (~5 KiB total) stay f32.
    w1, w2, w3, w4 = (w.astype(compute_dtype) for w in (w1, w2, w3, w4))
    b1, b2, b3, b4 = (b.astype(jnp.float32) for b in (b1, b2, b3, b4))

    B, input_dim = x.shape
    hidden = w1.shape[1]
    output_dim = w2.shape[1]

    # Ceil-div grid on the unpadded input: no extra pad/cast HBM passes.  The
    # partial last block's OOB output rows are masked by Pallas, and its
    # garbage input rows never feed valid rows (row-wise computation only).
    grid = (pl.cdiv(B, block_b),)

    def rep(shape):
        # Constant block index -> fetched once, VMEM-resident for the grid.
        return pl.BlockSpec(shape, lambda i: (0, 0))

    flops = 4 * B * hidden * (input_dim + output_dim)
    bytes_accessed = (
        B * input_dim * 4                                   # f32 x in
        + B * (output_dim + input_dim) * 2                  # bf16 outputs
        + 4 * hidden * (input_dim + output_dim)             # bf16 weights
        + 4 * (2 * hidden + input_dim + output_dim))        # f32 biases

    enc, dec = pl.pallas_call(
        autoencoder_kernel,
        out_shape=(
            jax.ShapeDtypeStruct((B, output_dim), compute_dtype),
            jax.ShapeDtypeStruct((B, input_dim), compute_dtype),
        ),
        grid_spec=pltpu.PrefetchScalarGridSpec(
            num_scalar_prefetch=0,
            grid=grid,
            in_specs=[
                pl.BlockSpec((block_b, input_dim), lambda i: (i, 0)),  # x tile
                rep((input_dim, hidden)), rep((1, hidden)),            # enc L1
                rep((hidden, output_dim)), rep((1, output_dim)),       # enc L2
                rep((output_dim, hidden)), rep((1, hidden)),           # dec L1
                rep((hidden, input_dim)), rep((1, input_dim)),         # dec L2
            ],
            out_specs=[
                pl.BlockSpec((block_b, output_dim), lambda i: (i, 0)),
                pl.BlockSpec((block_b, input_dim), lambda i: (i, 0)),
            ],
        ),
        compiler_params=pltpu.CompilerParams(
            dimension_semantics=("parallel",),
            vmem_limit_bytes=32 * 1024 * 1024,
        ),
        cost_estimate=pl.CostEstimate(
            flops=flops, transcendentals=0, bytes_accessed=bytes_accessed),
    )(x, w1, b1, w2, b2, w3, b3, w4, b4)

    return enc, dec


def autoencoder_forward(x, params, *, block_b=None,
                        compute_dtype=jnp.bfloat16):
    """Fused autoencoder forward. Returns (encoded, decoded) in compute_dtype."""
    if block_b is None:
        block_b = _default_block_b(x.shape[0])
    block_b = max(16, _round_up(block_b, 16))
    return _autoencoder_impl(x, params, block_b, compute_dtype)


def init_params(key, input_dim, output_dim, hidden=512, dtype=jnp.float32):
    """Deterministic synthetic parameters (PyTorch-Linear-like uniform init)."""
    ks = jax.random.split(key, 8)

    def linear(kw, kb, fan_in, fan_out):
        bound = 1.0 / (fan_in ** 0.5)
        w = jax.random.uniform(kw, (fan_in, fan_out), dtype, -bound, bound)
        b = jax.random.uniform(kb, (1, fan_out), dtype, -bound, bound)
        return w, b

    w1, b1 = linear(ks[0], ks[1], input_dim, hidden)
    w2, b2 = linear(ks[2], ks[3], hidden, output_dim)
    w3, b3 = linear(ks[4], ks[5], output_dim, hidden)
    w4, b4 = linear(ks[6], ks[7], hidden, input_dim)
    return (w1, b1, w2, b2, w3, b3, w4, b4)


def reference_forward(x, params, compute_dtype=jnp.bfloat16):
    """f32 math mirroring the kernel's dtype schedule (bf16 weights/acts, f32 bias)."""
    f32 = jnp.float32
    w1, b1, w2, b2, w3, b3, w4, b4 = params
    wq = lambda w: w.astype(compute_dtype).astype(f32)
    w1, w2, w3, w4 = (wq(w) for w in (w1, w2, w3, w4))
    b1, b2, b3, b4 = (b.astype(f32) for b in (b1, b2, b3, b4))
    rq = lambda h: jax.nn.relu(h).astype(compute_dtype).astype(f32)

    xf = x.astype(compute_dtype).astype(f32)
    h1 = rq(xf @ w1 + b1)
    enc = rq(h1 @ w2 + b2)
    h2 = rq(enc @ w3 + b3)
    dec = rq(h2 @ w4 + b4)
    return enc, dec


if __name__ == "__main__":
    key = jax.random.PRNGKey(0)
    k_x, k_p = jax.random.split(key)

    batch = 16
    input_dim = 256
    output_dim = 128
    hidden = 512

    x = jax.random.normal(k_x, (batch, input_dim), dtype=jnp.float32)
    params = init_params(k_p, input_dim, output_dim, hidden)

    enc, dec = autoencoder_forward(x, params)
    enc, dec = jax.block_until_ready((enc, dec))

    enc_ref, dec_ref = reference_forward(x, params)
    assert enc.shape == (batch, output_dim)
    assert dec.shape == (batch, input_dim)
    assert jnp.allclose(enc.astype(jnp.float32), enc_ref, atol=3e-2, rtol=3e-2)
    assert jnp.allclose(dec.astype(jnp.float32), dec_ref, atol=3e-2, rtol=3e-2)

    # Uneven batch exercises the ceil-div grid / masked partial-block path.
    x_odd = x[:13]
    enc_o, dec_o = autoencoder_forward(x_odd, params)
    enc_o, dec_o = jax.block_until_ready((enc_o, dec_o))
    assert enc_o.shape == (13, output_dim)
    assert dec_o.shape == (13, input_dim)
    assert jnp.allclose(enc_o.astype(jnp.float32), enc_ref[:13],
                        atol=3e-2, rtol=3e-2)
    assert jnp.allclose(dec_o.astype(jnp.float32), dec_ref[:13],
                        atol=3e-2, rtol=3e-2)

    print("KERNEL_OK")
</pallas_src>

<mosaic_0001>
module attributes {stable_mosaic.version = 11 : i64} {
  func.func @autoencoder_kernel(%arg0: i32, %arg1: memref<16x256xf32, #tpu.memory_space<vmem>>, %arg2: memref<256x512xbf16, #tpu.memory_space<vmem>>, %arg3: memref<1x512xf32, #tpu.memory_space<vmem>>, %arg4: memref<512x128xbf16, #tpu.memory_space<vmem>>, %arg5: memref<1x128xf32, #tpu.memory_space<vmem>>, %arg6: memref<128x512xbf16, #tpu.memory_space<vmem>>, %arg7: memref<1x512xf32, #tpu.memory_space<vmem>>, %arg8: memref<512x256xbf16, #tpu.memory_space<vmem>>, %arg9: memref<1x256xf32, #tpu.memory_space<vmem>>, %arg10: memref<16x128xbf16, #tpu.memory_space<vmem>>, %arg11: memref<16x256xbf16, #tpu.memory_space<vmem>>) attributes {dimension_semantics = [#tpu.dimension_semantics<parallel>], iteration_bounds = array<i64: 1>, scalar_prefetch = 0 : i64, scratch_operands = 0 : i64, tpu.core_type = #tpu.core_type<tc>, window_params = [{transform_indices = @transform_0, window_bounds = array<i64: 16, 256>}, {pipeline_mode = #tpu.pipeline_mode<synchronous>, transform_indices = @transform_1, window_bounds = array<i64: 256, 512>}, {pipeline_mode = #tpu.pipeline_mode<synchronous>, transform_indices = @transform_2, window_bounds = array<i64: 1, 512>}, {pipeline_mode = #tpu.pipeline_mode<synchronous>, transform_indices = @transform_3, window_bounds = array<i64: 512, 128>}, {pipeline_mode = #tpu.pipeline_mode<synchronous>, transform_indices = @transform_4, window_bounds = array<i64: 1, 128>}, {pipeline_mode = #tpu.pipeline_mode<synchronous>, transform_indices = @transform_5, window_bounds = array<i64: 128, 512>}, {pipeline_mode = #tpu.pipeline_mode<synchronous>, transform_indices = @transform_6, window_bounds = array<i64: 1, 512>}, {pipeline_mode = #tpu.pipeline_mode<synchronous>, transform_indices = @transform_7, window_bounds = array<i64: 512, 256>}, {pipeline_mode = #tpu.pipeline_mode<synchronous>, transform_indices = @transform_8, window_bounds = array<i64: 1, 256>}, {transform_indices = @transform_9, window_bounds = array<i64: 16, 128>}, {transform_indices = @transform_10, window_bounds = array<i64: 16, 256>}]} {
    %c0 = arith.constant 0 : index
    %c0_0 = arith.constant 0 : index
    %0 = vector.load %arg1[%c0, %c0_0] : memref<16x256xf32, #tpu.memory_space<vmem>>, vector<16x256xf32>
    %1 = arith.truncf %0 : vector<16x256xf32> to vector<16x256xbf16>
    %c0_1 = arith.constant 0 : index
    %c0_2 = arith.constant 0 : index
    %2 = vector.load %arg2[%c0_1, %c0_2] : memref<256x512xbf16, #tpu.memory_space<vmem>>, vector<256x512xbf16>
    %cst = arith.constant dense<0.000000e+00> : vector<16x512xf32>
    %3 = tpu.matmul %1, %2, %cst {dimension_numbers = #tpu.dot_dimension_numbers<[1], [0], [0], [1], [0, 0, 1, 1], [], []>} : vector<16x256xbf16>, vector<256x512xbf16>, vector<16x512xf32> -> vector<16x512xf32>
    %c0_3 = arith.constant 0 : index
    %c0_4 = arith.constant 0 : index
    %4 = vector.load %arg3[%c0_3, %c0_4] : memref<1x512xf32, #tpu.memory_space<vmem>>, vector<1x512xf32>
    %5 = vector.broadcast %4 : vector<1x512xf32> to vector<16x512xf32>
    %6 = arith.addf %3, %5 : vector<16x512xf32>
    %cst_5 = arith.constant 0.000000e+00 : f32
    %7 = vector.broadcast %cst_5 : f32 to vector<16x512xf32>
    %8 = arith.maximumf %6, %7 : vector<16x512xf32>
    %9 = arith.truncf %8 : vector<16x512xf32> to vector<16x512xbf16>
    %c0_6 = arith.constant 0 : index
    %c0_7 = arith.constant 0 : index
    %10 = vector.load %arg4[%c0_6, %c0_7] : memref<512x128xbf16, #tpu.memory_space<vmem>>, vector<512x128xbf16>
    %cst_8 = arith.constant dense<0.000000e+00> : vector<16x128xf32>
    %11 = tpu.matmul %9, %10, %cst_8 {dimension_numbers = #tpu.dot_dimension_numbers<[1], [0], [0], [1], [0, 0, 1, 1], [], []>} : vector<16x512xbf16>, vector<512x128xbf16>, vector<16x128xf32> -> vector<16x128xf32>
    %c0_9 = arith.constant 0 : index
    %c0_10 = arith.constant 0 : index
    %12 = vector.load %arg5[%c0_9, %c0_10] : memref<1x128xf32, #tpu.memory_space<vmem>>, vector<1x128xf32>
    %13 = vector.broadcast %12 : vector<1x128xf32> to vector<16x128xf32>
    %14 = arith.addf %11, %13 : vector<16x128xf32>
    %cst_11 = arith.constant 0.000000e+00 : f32
    %15 = vector.broadcast %cst_11 : f32 to vector<16x128xf32>
    %16 = arith.maximumf %14, %15 : vector<16x128xf32>
    %17 = arith.truncf %16 : vector<16x128xf32> to vector<16x128xbf16>
    %c0_12 = arith.constant 0 : index
    %c0_13 = arith.constant 0 : index
    %18 = vector.load %arg6[%c0_12, %c0_13] : memref<128x512xbf16, #tpu.memory_space<vmem>>, vector<128x512xbf16>
    %cst_14 = arith.constant dense<0.000000e+00> : vector<16x512xf32>
    %19 = tpu.matmul %17, %18, %cst_14 {dimension_numbers = #tpu.dot_dimension_numbers<[1], [0], [0], [1], [0, 0, 1, 1], [], []>} : vector<16x128xbf16>, vector<128x512xbf16>, vector<16x512xf32> -> vector<16x512xf32>
    %c0_15 = arith.constant 0 : index
    %c0_16 = arith.constant 0 : index
    %20 = vector.load %arg7[%c0_15, %c0_16] : memref<1x512xf32, #tpu.memory_space<vmem>>, vector<1x512xf32>
    %21 = vector.broadcast %20 : vector<1x512xf32> to vector<16x512xf32>
    %22 = arith.addf %19, %21 : vector<16x512xf32>
    %cst_17 = arith.constant 0.000000e+00 : f32
    %23 = vector.broadcast %cst_17 : f32 to vector<16x512xf32>
    %24 = arith.maximumf %22, %23 : vector<16x512xf32>
    %25 = arith.truncf %24 : vector<16x512xf32> to vector<16x512xbf16>
    %c0_18 = arith.constant 0 : index
    %c0_19 = arith.constant 0 : index
    %26 = vector.load %arg8[%c0_18, %c0_19] : memref<512x256xbf16, #tpu.memory_space<vmem>>, vector<512x256xbf16>
    %cst_20 = arith.constant dense<0.000000e+00> : vector<16x256xf32>
    %27 = tpu.matmul %25, %26, %cst_20 {dimension_numbers = #tpu.dot_dimension_numbers<[1], [0], [0], [1], [0, 0, 1, 1], [], []>} : vector<16x512xbf16>, vector<512x256xbf16>, vector<16x256xf32> -> vector<16x256xf32>
    %c0_21 = arith.constant 0 : index
    %c0_22 = arith.constant 0 : index
    %28 = vector.load %arg9[%c0_21, %c0_22] : memref<1x256xf32, #tpu.memory_space<vmem>>, vector<1x256xf32>
    %29 = vector.broadcast %28 : vector<1x256xf32> to vector<16x256xf32>
    %30 = arith.addf %27, %29 : vector<16x256xf32>
    %cst_23 = arith.constant 0.000000e+00 : f32
    %31 = vector.broadcast %cst_23 : f32 to vector<16x256xf32>
    %32 = arith.maximumf %30, %31 : vector<16x256xf32>
    %33 = arith.truncf %32 : vector<16x256xf32> to vector<16x256xbf16>
    %c0_24 = arith.constant 0 : index
    %c0_25 = arith.constant 0 : index
    %34 = vector.load %arg10[%c0_24, %c0_25] : memref<16x128xbf16, #tpu.memory_space<vmem>>, vector<16x128xbf16>
    tpu.vector_store %arg10[%c0_24, %c0_25], %17 {strides = array<i32>} : memref<16x128xbf16, #tpu.memory_space<vmem>>, vector<16x128xbf16>,
    %c0_26 = arith.constant 0 : index
    %c0_27 = arith.constant 0 : index
    %35 = vector.load %arg11[%c0_26, %c0_27] : memref<16x256xbf16, #tpu.memory_space<vmem>>, vector<16x256xbf16>
    tpu.vector_store %arg11[%c0_26, %c0_27], %33 {strides = array<i32>} : memref<16x256xbf16, #tpu.memory_space<vmem>>, vector<16x256xbf16>,
    return
  }
  func.func @transform_0(%arg0: i32) -> (i32, i32) {
    %c0_i32 = arith.constant 0 : i32
    %c0_i32_0 = arith.constant 0 : i32
    return %arg0, %c0_i32 : i32, i32
  }
  func.func @transform_1(%arg0: i32) -> (i32, i32) {
    %c0_i32 = arith.constant 0 : i32
    %c0_i32_0 = arith.constant 0 : i32
    %c0_i32_1 = arith.constant 0 : i32
    return %c0_i32, %c0_i32_0 : i32, i32
  }
  func.func @transform_2(%arg0: i32) -> (i32, i32) {
    %c0_i32 = arith.constant 0 : i32
    %c0_i32_0 = arith.constant 0 : i32
    %c0_i32_1 = arith.constant 0 : i32
    return %c0_i32, %c0_i32_0 : i32, i32
  }
  func.func @transform_3(%arg0: i32) -> (i32, i32) {
    %c0_i32 = arith.constant 0 : i32
    %c0_i32_0 = arith.constant 0 : i32
    %c0_i32_1 = arith.constant 0 : i32
    return %c0_i32, %c0_i32_0 : i32, i32
  }
  func.func @transform_4(%arg0: i32) -> (i32, i32) {
    %c0_i32 = arith.constant 0 : i32
    %c0_i32_0 = arith.constant 0 : i32
    %c0_i32_1 = arith.constant 0 : i32
    return %c0_i32, %c0_i32_0 : i32, i32
  }
  func.func @transform_5(%arg0: i32) -> (i32, i32) {
    %c0_i32 = arith.constant 0 : i32
    %c0_i32_0 = arith.constant 0 : i32
    %c0_i32_1 = arith.constant 0 : i32
    return %c0_i32, %c0_i32_0 : i32, i32
  }
  func.func @transform_6(%arg0: i32) -> (i32, i32) {
    %c0_i32 = arith.constant 0 : i32
    %c0_i32_0 = arith.constant 0 : i32
    %c0_i32_1 = arith.constant 0 : i32
    return %c0_i32, %c0_i32_0 : i32, i32
  }
  func.func @transform_7(%arg0: i32) -> (i32, i32) {
    %c0_i32 = arith.constant 0 : i32
    %c0_i32_0 = arith.constant 0 : i32
    %c0_i32_1 = arith.constant 0 : i32
    return %c0_i32, %c0_i32_0 : i32, i32
  }
  func.func @transform_8(%arg0: i32) -> (i32, i32) {
    %c0_i32 = arith.constant 0 : i32
    %c0_i32_0 = arith.constant 0 : i32
    %c0_i32_1 = arith.constant 0 : i32
    return %c0_i32, %c0_i32_0 : i32, i32
  }
  func.func @transform_9(%arg0: i32) -> (i32, i32) {
    %c0_i32 = arith.constant 0 : i32
    %c0_i32_0 = arith.constant 0 : i32
    return %arg0, %c0_i32 : i32, i32
  }
  func.func @transform_10(%arg0: i32) -> (i32, i32) {
    %c0_i32 = arith.constant 0 : i32
    %c0_i32_0 = arith.constant 0 : i32
    return %arg0, %c0_i32 : i32, i32
  }
}

</mosaic_0001>

<llo_original>
// kernel: _autoencoder_impl.1
$region0: #{_autoencoder_impl.1}
  #allocation0 [shape = 'u32[]', space=smem, size = 0x4, offset = 0x4, fixed_abs, tag = 'smem constant byte address 0x4 - core index']
  #allocation1 [shape = 'u32[144,128]{1,0:T(1,128)}', space=vmem, size = 0x12000, scoped, tag = 'internal scratch']
  %s0 = inlined_call_operand.vmem [shape: f32[16,256], index: 0, kind: input, shape index: {}]
  %s1 = inlined_call_operand.vmem [shape: bf16[256,512], index: 1, kind: input, shape index: {}]
  %s2 = inlined_call_operand.vmem [shape: f32[1,512], index: 2, kind: input, shape index: {}]
  %s3 = inlined_call_operand.vmem [shape: bf16[512,128], index: 3, kind: input, shape index: {}]
  %s4 = inlined_call_operand.vmem [shape: f32[1,128], index: 4, kind: input, shape index: {}]
  %s5 = inlined_call_operand.vmem [shape: bf16[128,512], index: 5, kind: input, shape index: {}]
  %s6 = inlined_call_operand.vmem [shape: f32[1,512], index: 6, kind: input, shape index: {}]
  %s7 = inlined_call_operand.vmem [shape: bf16[512,256], index: 7, kind: input, shape index: {}]
  %s8 = inlined_call_operand.vmem [shape: f32[1,256], index: 8, kind: input, shape index: {}]
  %s9 = inlined_call_operand.hbm [shape: bf16[16,128], index: 9, kind: output, shape index: {0}]
  %s10 = inlined_call_operand.hbm [shape: bf16[16,256], index: 10, kind: output, shape index: {1}]
  %11 = xla_tuple %s9, %s10
  %s12 = sld [smem:[#allocation0]]
  $region54: #{_autoencoder_impl.1} parent=0
    _
  %s14 = ssub.s32 1, %s12
  %s15 = scalar_select 0, %s14, %s12
  $region1: #{_autoencoder_impl.1} parent=0
    #allocation2 [shape = 'u8[4096]{0}', space=vmem, size = 0x1000, scoped, tag = 'output window, operand 0, single buffered']
    #allocation3 [shape = 's32[1]{0}', space=sflag, size = 0x4, scoped, tag = 'scoped memory for _autoencoder_impl.1']
    #allocation4 [shape = 'u8[8192]{0}', space=vmem, size = 0x2000, scoped, tag = 'output window, operand 1, single buffered']
    #allocation5 [shape = 's32[1]{0}', space=sflag, size = 0x4, scoped, tag = 'scoped memory for _autoencoder_impl.1']
    %16 = vsyncpa [#allocation3], 0
    %17 = vsyncpa [#allocation5], 0
    // Predicated region
    $region2: #{_autoencoder_impl.1} parent=1 // pred_check
      _
    $region3: #{_autoencoder_impl.1} parent=1 // pred_check_branch
      %19 = sbr.rel (0) target = $region5
    $region4: #{_autoencoder_impl.1} parent=1 // pred_region
      _
    $region5: #{_autoencoder_impl.1} parent=1 // pred_fallthru
      _
    // Predicated region
    $region6: #{_autoencoder_impl.1} parent=1 // pred_check
      _
    $region7: #{_autoencoder_impl.1} parent=1 // pred_check_branch
      %21 = sbr.rel (0) target = $region9
    $region8: #{_autoencoder_impl.1} parent=1 // pred_region
      _
    $region9: #{_autoencoder_impl.1} parent=1 // pred_fallthru
      _
    // Predicated region
    $region10: #{_autoencoder_impl.1} parent=1 // pred_check
      _
    $region11: #{_autoencoder_impl.1} parent=1 // pred_check_branch
      %23 = sbr.rel (0) target = $region13
    $region12: #{_autoencoder_impl.1} parent=1 // pred_region
      _
    $region13: #{_autoencoder_impl.1} parent=1 // pred_fallthru
      _
    // Predicated region
    $region14: #{_autoencoder_impl.1} parent=1 // pred_check
      _
    $region15: #{_autoencoder_impl.1} parent=1 // pred_check_branch
      %25 = sbr.rel (0) target = $region17
    $region16: #{_autoencoder_impl.1} parent=1 // pred_region
      _
    $region17: #{_autoencoder_impl.1} parent=1 // pred_fallthru
      _
    // Predicated region
    $region18: #{_autoencoder_impl.1} parent=1 // pred_check
      _
    $region19: #{_autoencoder_impl.1} parent=1 // pred_check_branch
      %27 = sbr.rel (0) target = $region21
    $region20: #{_autoencoder_impl.1} parent=1 // pred_region
      _
    $region21: #{_autoencoder_impl.1} parent=1 // pred_fallthru
      _
    // Predicated region
    $region22: #{_autoencoder_impl.1} parent=1 // pred_check
      _
    $region23: #{_autoencoder_impl.1} parent=1 // pred_check_branch
      %29 = sbr.rel (0) target = $region25
    $region24: #{_autoencoder_impl.1} parent=1 // pred_region
      _
    $region25: #{_autoencoder_impl.1} parent=1 // pred_fallthru
      _
    // Predicated region
    $region26: #{_autoencoder_impl.1} parent=1 // pred_check
      _
    $region27: #{_autoencoder_impl.1} parent=1 // pred_check_branch
      %31 = sbr.rel (0) target = $region29
    $region28: #{_autoencoder_impl.1} parent=1 // pred_region
      _
    $region29: #{_autoencoder_impl.1} parent=1 // pred_fallthru
      _
    // Predicated region
    $region30: #{_autoencoder_impl.1} parent=1 // pred_check
      _
    $region31: #{_autoencoder_impl.1} parent=1 // pred_check_branch
      %33 = sbr.rel (0) target = $region33
    $region32: #{_autoencoder_impl.1} parent=1 // pred_region
      _
    $region33: #{_autoencoder_impl.1} parent=1 // pred_fallthru
      _
    // Predicated region
    $region34: #{_autoencoder_impl.1} parent=1 // pred_check
      _
    $region35: #{_autoencoder_impl.1} parent=1 // pred_check_branch
      %35 = sbr.rel (0) target = $region37
    $region36: #{_autoencoder_impl.1} parent=1 // pred_region
      _
    $region37: #{_autoencoder_impl.1} parent=1 // pred_fallthru
      _
    %v37 = vld [vmem:[%s0] sm:$0xff]
    %v38 = vld [vmem:[%s0 + $0x8] sm:$0xff]
    %v39 = vld [vmem:[%s0 + $0x10] sm:$0xff]
    %v40 = vld [vmem:[%s0 + $0x18] sm:$0xff]
    %v41 = vpack.c.bf16 %v39, %v37
    %v42 = vpack.c.bf16 %v40, %v38
    %v43 = vld [vmem:[%s1] sm:$0xff]
    %v44 = vld [vmem:[%s1 + $0x8] sm:$0xff]
    %v45 = vld [vmem:[%s1 + $0x10] sm:$0xff]
    %v46 = vld [vmem:[%s1 + $0x18] sm:$0xff]
    %v47 = vld [vmem:[%s1 + $0x20] sm:$0xff]
    %v48 = vld [vmem:[%s1 + $0x28] sm:$0xff]
    %v49 = vld [vmem:[%s1 + $0x30] sm:$0xff]
    %v50 = vld [vmem:[%s1 + $0x38] sm:$0xff]
    %v51 = vld [vmem:[%s1 + $0x40] sm:$0xff]
    %v52 = vld [vmem:[%s1 + $0x48] sm:$0xff]
    %v53 = vld [vmem:[%s1 + $0x50] sm:$0xff]
    %v54 = vld [vmem:[%s1 + $0x58] sm:$0xff]
    %v55 = vld [vmem:[%s1 + $0x60] sm:$0xff]
    %v56 = vld [vmem:[%s1 + $0x68] sm:$0xff]
    %v57 = vld [vmem:[%s1 + $0x70] sm:$0xff]
    %v58 = vld [vmem:[%s1 + $0x78] sm:$0xff]
    %v59 = vld [vmem:[%s1 + $0x80] sm:$0xff]
    %v60 = vld [vmem:[%s1 + $0x88] sm:$0xff]
    %v61 = vld [vmem:[%s1 + $0x90] sm:$0xff]
    %v62 = vld [vmem:[%s1 + $0x98] sm:$0xff]
    %v63 = vld [vmem:[%s1 + $0xa0] sm:$0xff]
    %v64 = vld [vmem:[%s1 + $0xa8] sm:$0xff]
    %v65 = vld [vmem:[%s1 + $0xb0] sm:$0xff]
    %v66 = vld [vmem:[%s1 + $0xb8] sm:$0xff]
    %v67 = vld [vmem:[%s1 + $0xc0] sm:$0xff]
    %v68 = vld [vmem:[%s1 + $0xc8] sm:$0xff]
    %v69 = vld [vmem:[%s1 + $0xd0] sm:$0xff]
    %v70 = vld [vmem:[%s1 + $0xd8] sm:$0xff]
    %v71 = vld [vmem:[%s1 + $0xe0] sm:$0xff]
    %v72 = vld [vmem:[%s1 + $0xe8] sm:$0xff]
    %v73 = vld [vmem:[%s1 + $0xf0] sm:$0xff]
    %v74 = vld [vmem:[%s1 + $0xf8] sm:$0xff]
    %v75 = vld [vmem:[%s1 + $0x100] sm:$0xff]
    %v76 = vld [vmem:[%s1 + $0x108] sm:$0xff]
    %v77 = vld [vmem:[%s1 + $0x110] sm:$0xff]
    %v78 = vld [vmem:[%s1 + $0x118] sm:$0xff]
    %v79 = vld [vmem:[%s1 + $0x120] sm:$0xff]
    %v80 = vld [vmem:[%s1 + $0x128] sm:$0xff]
    %v81 = vld [vmem:[%s1 + $0x130] sm:$0xff]
    %v82 = vld [vmem:[%s1 + $0x138] sm:$0xff]
    %v83 = vld [vmem:[%s1 + $0x140] sm:$0xff]
    %v84 = vld [vmem:[%s1 + $0x148] sm:$0xff]
    %v85 = vld [vmem:[%s1 + $0x150] sm:$0xff]
    %v86 = vld [vmem:[%s1 + $0x158] sm:$0xff]
    %v87 = vld [vmem:[%s1 + $0x160] sm:$0xff]
    %v88 = vld [vmem:[%s1 + $0x168] sm:$0xff]
    %v89 = vld [vmem:[%s1 + $0x170] sm:$0xff]
    %v90 = vld [vmem:[%s1 + $0x178] sm:$0xff]
    %v91 = vld [vmem:[%s1 + $0x180] sm:$0xff]
    %v92 = vld [vmem:[%s1 + $0x188] sm:$0xff]
    %v93 = vld [vmem:[%s1 + $0x190] sm:$0xff]
    %v94 = vld [vmem:[%s1 + $0x198] sm:$0xff]
    %v95 = vld [vmem:[%s1 + $0x1a0] sm:$0xff]
    %v96 = vld [vmem:[%s1 + $0x1a8] sm:$0xff]
    %v97 = vld [vmem:[%s1 + $0x1b0] sm:$0xff]
    %v98 = vld [vmem:[%s1 + $0x1b8] sm:$0xff]
    %v99 = vld [vmem:[%s1 + $0x1c0] sm:$0xff]
    %v100 = vld [vmem:[%s1 + $0x1c8] sm:$0xff]
    %v101 = vld [vmem:[%s1 + $0x1d0] sm:$0xff]
    %v102 = vld [vmem:[%s1 + $0x1d8] sm:$0xff]
    %v103 = vld [vmem:[%s1 + $0x1e0] sm:$0xff]
    %v104 = vld [vmem:[%s1 + $0x1e8] sm:$0xff]
    %v105 = vld [vmem:[%s1 + $0x1f0] sm:$0xff]
    %v106 = vld [vmem:[%s1 + $0x1f8] sm:$0xff]
    %v107 = vld [vmem:[%s2] sm:$0xf]
    %v109 = vlaneseq
    %v110 = vshrl.u32 %v109, 7
    %v111 = vsub.s32 0, %v110
    %v112 = vrot.slane %v107, %v111
    %v113 = vlaneseq
    %v114 = vshrl.u32 %v113, 7
    %v115 = vsub.s32 1, %v114
    %v116 = vrot.slane %v107, %v115
    %v117 = vlaneseq
    %v118 = vshrl.u32 %v117, 7
    %v119 = vsub.s32 2, %v118
    %v120 = vrot.slane %v107, %v119
    %v121 = vlaneseq
    %v122 = vshrl.u32 %v121, 7
    %v123 = vsub.s32 3, %v122
    %v124 = vrot.slane %v107, %v123
    %v193 = vunpack.c.l.b16 %v43
    %v194 = vunpack.c.h.b16 %v43
    %v195 = vunpack.c.l.b16 %v44
    %v196 = vunpack.c.h.b16 %v44
    %v197 = vunpack.c.l.b16 %v45
    %v198 = vunpack.c.h.b16 %v45
    %v199 = vunpack.c.l.b16 %v46
    %v200 = vunpack.c.h.b16 %v46
    %v201 = vunpack.c.l.b16 %v47
    %v202 = vunpack.c.h.b16 %v47
    %v203 = vunpack.c.l.b16 %v48
    %v204 = vunpack.c.h.b16 %v48
    %v205 = vunpack.c.l.b16 %v49
    %v206 = vunpack.c.h.b16 %v49
    %v207 = vunpack.c.l.b16 %v50
    %v208 = vunpack.c.h.b16 %v50
    %v209 = vunpack.c.l.b16 %v51
    %v210 = vunpack.c.h.b16 %v51
    %v211 = vunpack.c.l.b16 %v52
    %v212 = vunpack.c.h.b16 %v52
    %v213 = vunpack.c.l.b16 %v53
    %v214 = vunpack.c.h.b16 %v53
    %v215 = vunpack.c.l.b16 %v54
    %v216 = vunpack.c.h.b16 %v54
    %v217 = vunpack.c.l.b16 %v55
    %v218 = vunpack.c.h.b16 %v55
    %v219 = vunpack.c.l.b16 %v56
    %v220 = vunpack.c.h.b16 %v56
    %v221 = vunpack.c.l.b16 %v57
    %v222 = vunpack.c.h.b16 %v57
    %v223 = vunpack.c.l.b16 %v58
    %v224 = vunpack.c.h.b16 %v58
    %v225 = vunpack.c.l.b16 %v59
    %v226 = vunpack.c.h.b16 %v59
    %v227 = vunpack.c.l.b16 %v60
    %v228 = vunpack.c.h.b16 %v60
    %v229 = vunpack.c.l.b16 %v61
    %v230 = vunpack.c.h.b16 %v61
    %v231 = vunpack.c.l.b16 %v62
    %v232 = vunpack.c.h.b16 %v62
    %v233 = vunpack.c.l.b16 %v63
    %v234 = vunpack.c.h.b16 %v63
    %v235 = vunpack.c.l.b16 %v64
    %v236 = vunpack.c.h.b16 %v64
    %v237 = vunpack.c.l.b16 %v65
    %v238 = vunpack.c.h.b16 %v65
    %v239 = vunpack.c.l.b16 %v66
    %v240 = vunpack.c.h.b16 %v66
    %v241 = vunpack.c.l.b16 %v67
    %v242 = vunpack.c.h.b16 %v67
    %v243 = vunpack.c.l.b16 %v68
    %v244 = vunpack.c.h.b16 %v68
    %v245 = vunpack.c.l.b16 %v69
    %v246 = vunpack.c.h.b16 %v69
    %v247 = vunpack.c.l.b16 %v70
    %v248 = vunpack.c.h.b16 %v70
    %v249 = vunpack.c.l.b16 %v71
    %v250 = vunpack.c.h.b16 %v71
    %v251 = vunpack.c.l.b16 %v72
    %v252 = vunpack.c.h.b16 %v72
    %v253 = vunpack.c.l.b16 %v73
    %v254 = vunpack.c.h.b16 %v73
    %v255 = vunpack.c.l.b16 %v74
    %v256 = vunpack.c.h.b16 %v74
    %v257 = vunpack.c.l.b16 %v75
    %v258 = vunpack.c.h.b16 %v75
    %v259 = vunpack.c.l.b16 %v76
    %v260 = vunpack.c.h.b16 %v76
    %v261 = vunpack.c.l.b16 %v77
    %v262 = vunpack.c.h.b16 %v77
    %v263 = vunpack.c.l.b16 %v78
    %v264 = vunpack.c.h.b16 %v78
    %v265 = vunpack.c.l.b16 %v79
    %v266 = vunpack.c.h.b16 %v79
    %v267 = vunpack.c.l.b16 %v80
    %v268 = vunpack.c.h.b16 %v80
    %v269 = vunpack.c.l.b16 %v81
    %v270 = vunpack.c.h.b16 %v81
    %v271 = vunpack.c.l.b16 %v82
    %v272 = vunpack.c.h.b16 %v82
    %v273 = vunpack.c.l.b16 %v83
    %v274 = vunpack.c.h.b16 %v83
    %v275 = vunpack.c.l.b16 %v84
    %v276 = vunpack.c.h.b16 %v84
    %v277 = vunpack.c.l.b16 %v85
    %v278 = vunpack.c.h.b16 %v85
    %v279 = vunpack.c.l.b16 %v86
    %v280 = vunpack.c.h.b16 %v86
    %v281 = vunpack.c.l.b16 %v87
    %v282 = vunpack.c.h.b16 %v87
    %v283 = vunpack.c.l.b16 %v88
    %v284 = vunpack.c.h.b16 %v88
    %v285 = vunpack.c.l.b16 %v89
    %v286 = vunpack.c.h.b16 %v89
    %v287 = vunpack.c.l.b16 %v90
    %v288 = vunpack.c.h.b16 %v90
    %v289 = vunpack.c.l.b16 %v91
    %v290 = vunpack.c.h.b16 %v91
    %v291 = vunpack.c.l.b16 %v92
    %v292 = vunpack.c.h.b16 %v92
    %v293 = vunpack.c.l.b16 %v93
    %v294 = vunpack.c.h.b16 %v93
    %v295 = vunpack.c.l.b16 %v94
    %v296 = vunpack.c.h.b16 %v94
    %v297 = vunpack.c.l.b16 %v95
    %v298 = vunpack.c.h.b16 %v95
    %v299 = vunpack.c.l.b16 %v96
    %v300 = vunpack.c.h.b16 %v96
    %v301 = vunpack.c.l.b16 %v97
    %v302 = vunpack.c.h.b16 %v97
    %v303 = vunpack.c.l.b16 %v98
    %v304 = vunpack.c.h.b16 %v98
    %v305 = vunpack.c.l.b16 %v99
    %v306 = vunpack.c.h.b16 %v99
    %v307 = vunpack.c.l.b16 %v100
    %v308 = vunpack.c.h.b16 %v100
    %v309 = vunpack.c.l.b16 %v101
    %v310 = vunpack.c.h.b16 %v101
    %v311 = vunpack.c.l.b16 %v102
    %v312 = vunpack.c.h.b16 %v102
    %v313 = vunpack.c.l.b16 %v103
    %v314 = vunpack.c.h.b16 %v103
    %v315 = vunpack.c.l.b16 %v104
    %v316 = vunpack.c.h.b16 %v104
    %v317 = vunpack.c.l.b16 %v105
    %v318 = vunpack.c.h.b16 %v105
    %v319 = vunpack.c.l.b16 %v106
    %v320 = vunpack.c.h.b16 %v106
    %v321 = vpack.c.b16 %v197, %v193
    %v322 = vpack.c.b16 %v198, %v194
    %v323 = vpack.c.b16 %v199, %v195
    %v324 = vpack.c.b16 %v200, %v196
    %v325 = vpack.c.b16 %v205, %v201
    %v326 = vpack.c.b16 %v206, %v202
    %v327 = vpack.c.b16 %v207, %v203
    %v328 = vpack.c.b16 %v208, %v204
    %v329 = vpack.c.b16 %v213, %v209
    %v330 = vpack.c.b16 %v214, %v210
    %v331 = vpack.c.b16 %v215, %v211
    %v332 = vpack.c.b16 %v216, %v212
    %v333 = vpack.c.b16 %v221, %v217
    %v334 = vpack.c.b16 %v222, %v218
    %v335 = vpack.c.b16 %v223, %v219
    %v336 = vpack.c.b16 %v224, %v220
    %v337 = vpack.c.b16 %v229, %v225
    %v338 = vpack.c.b16 %v230, %v226
    %v339 = vpack.c.b16 %v231, %v227
    %v340 = vpack.c.b16 %v232, %v228
    %v341 = vpack.c.b16 %v237, %v233
    %v342 = vpack.c.b16 %v238, %v234
    %v343 = vpack.c.b16 %v239, %v235
    %v344 = vpack.c.b16 %v240, %v236
    %v345 = vpack.c.b16 %v245, %v241
    %v346 = vpack.c.b16 %v246, %v242
    %v347 = vpack.c.b16 %v247, %v243
    %v348 = vpack.c.b16 %v248, %v244
    %v349 = vpack.c.b16 %v253, %v249
    %v350 = vpack.c.b16 %v254, %v250
    %v351 = vpack.c.b16 %v255, %v251
    %v352 = vpack.c.b16 %v256, %v252
    %v353 = vpack.c.b16 %v261, %v257
    %v354 = vpack.c.b16 %v262, %v258
    %v355 = vpack.c.b16 %v263, %v259
    %v356 = vpack.c.b16 %v264, %v260
    %v357 = vpack.c.b16 %v269, %v265
    %v358 = vpack.c.b16 %v270, %v266
    %v359 = vpack.c.b16 %v271, %v267
    %v360 = vpack.c.b16 %v272, %v268
    %v361 = vpack.c.b16 %v277, %v273
    %v362 = vpack.c.b16 %v278, %v274
    %v363 = vpack.c.b16 %v279, %v275
    %v364 = vpack.c.b16 %v280, %v276
    %v365 = vpack.c.b16 %v285, %v281
    %v366 = vpack.c.b16 %v286, %v282
    %v367 = vpack.c.b16 %v287, %v283
    %v368 = vpack.c.b16 %v288, %v284
    %v369 = vpack.c.b16 %v293, %v289
    %v370 = vpack.c.b16 %v294, %v290
    %v371 = vpack.c.b16 %v295, %v291
    %v372 = vpack.c.b16 %v296, %v292
    %v373 = vpack.c.b16 %v301, %v297
    %v374 = vpack.c.b16 %v302, %v298
    %v375 = vpack.c.b16 %v303, %v299
    %v376 = vpack.c.b16 %v304, %v300
    %v377 = vpack.c.b16 %v309, %v305
    %v378 = vpack.c.b16 %v310, %v306
    %v379 = vpack.c.b16 %v311, %v307
    %v380 = vpack.c.b16 %v312, %v308
    %v381 = vpack.c.b16 %v317, %v313
    %v382 = vpack.c.b16 %v318, %v314
    %v383 = vpack.c.b16 %v319, %v315
    %v384 = vpack.c.b16 %v320, %v316
    %449 = vmatprep.subr.bf16.mxu0 %v322
    %450 = vmatpush1.bf16.msra.mxu0 %v321
    %451 = vmatprep.subr.bf16.mxu0 %v326
    %452 = vmatpush1.bf16.msra.mxu0 %v325
    %453 = vmatprep.subr.bf16.mxu0 %v330
    %454 = vmatpush1.bf16.msra.mxu0 %v329
    %455 = vmatprep.subr.bf16.mxu0 %v334
    %456 = vmatpush1.bf16.msra.mxu0 %v333
    %457 = vmatprep.subr.bf16.mxu0 %v338
    %458 = vmatpush1.bf16.msra.mxu0 %v337
    %459 = vmatprep.subr.bf16.mxu0 %v342
    %460 = vmatpush1.bf16.msra.mxu0 %v341
    %461 = vmatprep.subr.bf16.mxu0 %v346
    %462 = vmatpush1.bf16.msra.mxu0 %v345
    %463 = vmatprep.subr.bf16.mxu0 %v350
    %464 = vmatpush1.bf16.msra.mxu0 %v349
    %465 = vmatprep.subr.bf16.mxu0 %v354
    %466 = vmatpush1.bf16.msra.mxu0 %v353
    %467 = vmatprep.subr.bf16.mxu0 %v358
    %468 = vmatpush1.bf16.msra.mxu0 %v357
    %469 = vmatprep.subr.bf16.mxu0 %v362
    %470 = vmatpush1.bf16.msra.mxu0 %v361
    %471 = vmatprep.subr.bf16.mxu0 %v366
    %472 = vmatpush1.bf16.msra.mxu0 %v365
    %473 = vmatprep.subr.bf16.mxu0 %v370
    %474 = vmatpush1.bf16.msra.mxu0 %v369
    %475 = vmatprep.subr.bf16.mxu0 %v374
    %476 = vmatpush1.bf16.msra.mxu0 %v373
    %477 = vmatprep.subr.bf16.mxu0 %v378
    %478 = vmatpush1.bf16.msra.mxu0 %v377
    %479 = vmatprep.subr.bf16.mxu0 %v382
    %480 = vmatpush1.bf16.msra.mxu0 %v381
    %481 = vmatprep.mubr.bf16.mxu0 %v42
    %482 = vmatmul.mubr.bf16.gmra.mrb[0].mxu0 %v41
    %v483 = vpop.f32.mrb[0].mxu0
    %v484 = vadd.f32 %v112, %v483
    %v485 = vpop.f32.mrb[0].mxu0
    %v486 = vadd.f32 %v116, %v485
    %v487 = vpop.f32.mrb[0].mxu0
    %v488 = vadd.f32 %v112, %v487
    %v489 = vpop.f32.mrb[0].mxu0
    %v490 = vadd.f32 %v116, %v489
    %491 = vdwg.mxu0
    %492 = vmatprep.subr.bf16.mxu0 %v324
    %493 = vmatpush1.bf16.msra.mxu0 %v323
    %494 = vmatprep.subr.bf16.mxu0 %v328
    %495 = vmatpush1.bf16.msra.mxu0 %v327
    %496 = vmatprep.subr.bf16.mxu0 %v332
    %497 = vmatpush1.bf16.msra.mxu0 %v331
    %498 = vmatprep.subr.bf16.mxu0 %v336
    %499 = vmatpush1.bf16.msra.mxu0 %v335
    %500 = vmatprep.subr.bf16.mxu0 %v340
    %501 = vmatpush1.bf16.msra.mxu0 %v339
    %502 = vmatprep.subr.bf16.mxu0 %v344
    %503 = vmatpush1.bf16.msra.mxu0 %v343
    %504 = vmatprep.subr.bf16.mxu0 %v348
    %505 = vmatpush1.bf16.msra.mxu0 %v347
    %506 = vmatprep.subr.bf16.mxu0 %v352
    %507 = vmatpush1.bf16.msra.mxu0 %v351
    %508 = vmatprep.subr.bf16.mxu0 %v356
    %509 = vmatpush1.bf16.msra.mxu0 %v355
    %510 = vmatprep.subr.bf16.mxu0 %v360
    %511 = vmatpush1.bf16.msra.mxu0 %v359
    %512 = vmatprep.subr.bf16.mxu0 %v364
    %513 = vmatpush1.bf16.msra.mxu0 %v363
    %514 = vmatprep.subr.bf16.mxu0 %v368
    %515 = vmatpush1.bf16.msra.mxu0 %v367
    %516 = vmatprep.subr.bf16.mxu0 %v372
    %517 = vmatpush1.bf16.msra.mxu0 %v371
    %518 = vmatprep.subr.bf16.mxu0 %v376
    %519 = vmatpush1.bf16.msra.mxu0 %v375
    %520 = vmatprep.subr.bf16.mxu0 %v380
    %521 = vmatpush1.bf16.msra.mxu0 %v379
    %522 = vmatprep.subr.bf16.mxu0 %v384
    %523 = vmatpush1.bf16.msra.mxu0 %v383
    %524 = vmatprep.mubr.bf16.mxu0 %v42
    %525 = vmatmul.mubr.bf16.gmra.mrb[0].mxu0 %v41
    %v526 = vpop.f32.mrb[0].mxu0
    %v527 = vadd.f32 %v120, %v526
    %v528 = vpop.f32.mrb[0].mxu0
    %v529 = vadd.f32 %v124, %v528
    %v530 = vpop.f32.mrb[0].mxu0
    %v531 = vadd.f32 %v120, %v530
    %v532 = vpop.f32.mrb[0].mxu0
    %v533 = vadd.f32 %v124, %v532
    %534 = vdwg.mxu0
    %v535 = vmax.f32 %v484, 0.0
    %v536 = vmax.f32 %v486, 0.0
    %v537 = vmax.f32 %v527, 0.0
    %v538 = vmax.f32 %v529, 0.0
    %v539 = vmax.f32 %v488, 0.0
    %v540 = vmax.f32 %v490, 0.0
    %v541 = vmax.f32 %v531, 0.0
    %v542 = vmax.f32 %v533, 0.0
    %v543 = vpack.c.bf16 %v539, %v535
    %v544 = vpack.c.bf16 %v540, %v536
    %v545 = vpack.c.bf16 %v541, %v537
    %v546 = vpack.c.bf16 %v542, %v538
    %v547 = vld [vmem:[%s3] sm:$0xf]
    %v548 = vld [vmem:[%s3 + $0x4] sm:$0xf]
    %v549 = vld [vmem:[%s3 + $0x8] sm:$0xf]
    %v550 = vld [vmem:[%s3 + $0xc] sm:$0xf]
    %v551 = vld [vmem:[%s3 + $0x10] sm:$0xf]
    %v552 = vld [vmem:[%s3 + $0x14] sm:$0xf]
    %v553 = vld [vmem:[%s3 + $0x18] sm:$0xf]
    %v554 = vld [vmem:[%s3 + $0x1c] sm:$0xf]
    %v555 = vld [vmem:[%s3 + $0x20] sm:$0xf]
    %v556 = vld [vmem:[%s3 + $0x24] sm:$0xf]
    %v557 = vld [vmem:[%s3 + $0x28] sm:$0xf]
    %v558 = vld [vmem:[%s3 + $0x2c] sm:$0xf]
    %v559 = vld [vmem:[%s3 + $0x30] sm:$0xf]
    %v560 = vld [vmem:[%s3 + $0x34] sm:$0xf]
    %v561 = vld [vmem:[%s3 + $0x38] sm:$0xf]
    %v562 = vld [vmem:[%s3 + $0x3c] sm:$0xf]
    %v563 = vld [vmem:[%s3 + $0x40] sm:$0xf]
    %v564 = vld [vmem:[%s3 + $0x44] sm:$0xf]
    %v565 = vld [vmem:[%s3 + $0x48] sm:$0xf]
    %v566 = vld [vmem:[%s3 + $0x4c] sm:$0xf]
    %v567 = vld [vmem:[%s3 + $0x50] sm:$0xf]
    %v568 = vld [vmem:[%s3 + $0x54] sm:$0xf]
    %v569 = vld [vmem:[%s3 + $0x58] sm:$0xf]
    %v570 = vld [vmem:[%s3 + $0x5c] sm:$0xf]
    %v571 = vld [vmem:[%s3 + $0x60] sm:$0xf]
    %v572 = vld [vmem:[%s3 + $0x64] sm:$0xf]
    %v573 = vld [vmem:[%s3 + $0x68] sm:$0xf]
    %v574 = vld [vmem:[%s3 + $0x6c] sm:$0xf]
    %v575 = vld [vmem:[%s3 + $0x70] sm:$0xf]
    %v576 = vld [vmem:[%s3 + $0x74] sm:$0xf]
    %v577 = vld [vmem:[%s3 + $0x78] sm:$0xf]
    %v578 = vld [vmem:[%s3 + $0x7c] sm:$0xf]
    %v579 = vld [vmem:[%s3 + $0x80] sm:$0xf]
    %v580 = vld [vmem:[%s3 + $0x84] sm:$0xf]
    %v581 = vld [vmem:[%s3 + $0x88] sm:$0xf]
    %v582 = vld [vmem:[%s3 + $0x8c] sm:$0xf]
    %v583 = vld [vmem:[%s3 + $0x90] sm:$0xf]
    %v584 = vld [vmem:[%s3 + $0x94] sm:$0xf]
    %v585 = vld [vmem:[%s3 + $0x98] sm:$0xf]
    %v586 = vld [vmem:[%s3 + $0x9c] sm:$0xf]
    %v587 = vld [vmem:[%s3 + $0xa0] sm:$0xf]
    %v588 = vld [vmem:[%s3 + $0xa4] sm:$0xf]
    %v589 = vld [vmem:[%s3 + $0xa8] sm:$0xf]
    %v590 = vld [vmem:[%s3 + $0xac] sm:$0xf]
    %v591 = vld [vmem:[%s3 + $0xb0] sm:$0xf]
    %v592 = vld [vmem:[%s3 + $0xb4] sm:$0xf]
    %v593 = vld [vmem:[%s3 + $0xb8] sm:$0xf]
    %v594 = vld [vmem:[%s3 + $0xbc] sm:$0xf]
    %v595 = vld [vmem:[%s3 + $0xc0] sm:$0xf]
    %v596 = vld [vmem:[%s3 + $0xc4] sm:$0xf]
    %v597 = vld [vmem:[%s3 + $0xc8] sm:$0xf]
    %v598 = vld [vmem:[%s3 + $0xcc] sm:$0xf]
    %v599 = vld [vmem:[%s3 + $0xd0] sm:$0xf]
    %v600 = vld [vmem:[%s3 + $0xd4] sm:$0xf]
    %v601 = vld [vmem:[%s3 + $0xd8] sm:$0xf]
    %v602 = vld [vmem:[%s3 + $0xdc] sm:$0xf]
    %v603 = vld [vmem:[%s3 + $0xe0] sm:$0xf]
    %v604 = vld [vmem:[%s3 + $0xe4] sm:$0xf]
    %v605 = vld [vmem:[%s3 + $0xe8] sm:$0xf]
    %v606 = vld [vmem:[%s3 + $0xec] sm:$0xf]
    %v607 = vld [vmem:[%s3 + $0xf0] sm:$0xf]
    %v608 = vld [vmem:[%s3 + $0xf4] sm:$0xf]
    %v609 = vld [vmem:[%s3 + $0xf8] sm:$0xf]
    %v610 = vld [vmem:[%s3 + $0xfc] sm:$0xf]
    %v611 = vld [vmem:[%s4] sm:$0x1]
    %v613 = vlaneseq
    %v614 = vshrl.u32 %v613, 7
    %v615 = vsub.s32 0, %v614
    %v616 = vrot.slane %v611, %v615
    %v682 = vunpack.c.l.b16 %v547
    %v683 = vunpack.c.l.b16 %v548
    %v684 = vunpack.c.l.b16 %v549
    %v685 = vunpack.c.l.b16 %v550
    %v686 = vunpack.c.l.b16 %v551
    %v687 = vunpack.c.l.b16 %v552
    %v688 = vunpack.c.l.b16 %v553
    %v689 = vunpack.c.l.b16 %v554
    %v690 = vunpack.c.l.b16 %v555
    %v691 = vunpack.c.l.b16 %v556
    %v692 = vunpack.c.l.b16 %v557
    %v693 = vunpack.c.l.b16 %v558
    %v694 = vunpack.c.l.b16 %v559
    %v695 = vunpack.c.l.b16 %v560
    %v696 = vunpack.c.l.b16 %v561
    %v697 = vunpack.c.l.b16 %v562
    %v698 = vunpack.c.l.b16 %v563
    %v699 = vunpack.c.l.b16 %v564
    %v700 = vunpack.c.l.b16 %v565
    %v701 = vunpack.c.l.b16 %v566
    %v702 = vunpack.c.l.b16 %v567
    %v703 = vunpack.c.l.b16 %v568
    %v704 = vunpack.c.l.b16 %v569
    %v705 = vunpack.c.l.b16 %v570
    %v706 = vunpack.c.l.b16 %v571
    %v707 = vunpack.c.l.b16 %v572
    %v708 = vunpack.c.l.b16 %v573
    %v709 = vunpack.c.l.b16 %v574
    %v710 = vunpack.c.l.b16 %v575
    %v711 = vunpack.c.l.b16 %v576
    %v712 = vunpack.c.l.b16 %v577
    %v713 = vunpack.c.l.b16 %v578
    %v714 = vunpack.c.l.b16 %v579
    %v715 = vunpack.c.l.b16 %v580
    %v716 = vunpack.c.l.b16 %v581
    %v717 = vunpack.c.l.b16 %v582
    %v718 = vunpack.c.l.b16 %v583
    %v719 = vunpack.c.l.b16 %v584
    %v720 = vunpack.c.l.b16 %v585
    %v721 = vunpack.c.l.b16 %v586
    %v722 = vunpack.c.l.b16 %v587
    %v723 = vunpack.c.l.b16 %v588
    %v724 = vunpack.c.l.b16 %v589
    %v725 = vunpack.c.l.b16 %v590
    %v726 = vunpack.c.l.b16 %v591
    %v727 = vunpack.c.l.b16 %v592
    %v728 = vunpack.c.l.b16 %v593
    %v729 = vunpack.c.l.b16 %v594
    %v730 = vunpack.c.l.b16 %v595
    %v731 = vunpack.c.l.b16 %v596
    %v732 = vunpack.c.l.b16 %v597
    %v733 = vunpack.c.l.b16 %v598
    %v734 = vunpack.c.l.b16 %v599
    %v735 = vunpack.c.l.b16 %v600
    %v736 = vunpack.c.l.b16 %v601
    %v737 = vunpack.c.l.b16 %v602
    %v738 = vunpack.c.l.b16 %v603
    %v739 = vunpack.c.l.b16 %v604
    %v740 = vunpack.c.l.b16 %v605
    %v741 = vunpack.c.l.b16 %v606
    %v742 = vunpack.c.l.b16 %v607
    %v743 = vunpack.c.l.b16 %v608
    %v744 = vunpack.c.l.b16 %v609
    %v745 = vunpack.c.l.b16 %v610
    %v746 = vpack.c.b16 %v683, %v682
    %v747 = vpack.c.b16 %v685, %v684
    %v748 = vpack.c.b16 %v687, %v686
    %v749 = vpack.c.b16 %v689, %v688
    %v750 = vpack.c.b16 %v691, %v690
    %v751 = vpack.c.b16 %v693, %v692
    %v752 = vpack.c.b16 %v695, %v694
    %v753 = vpack.c.b16 %v697, %v696
    %v754 = vpack.c.b16 %v699, %v698
    %v755 = vpack.c.b16 %v701, %v700
    %v756 = vpack.c.b16 %v703, %v702
    %v757 = vpack.c.b16 %v705, %v704
    %v758 = vpack.c.b16 %v707, %v706
    %v759 = vpack.c.b16 %v709, %v708
    %v760 = vpack.c.b16 %v711, %v710
    %v761 = vpack.c.b16 %v713, %v712
    %v762 = vpack.c.b16 %v715, %v714
    %v763 = vpack.c.b16 %v717, %v716
    %v764 = vpack.c.b16 %v719, %v718
    %v765 = vpack.c.b16 %v721, %v720
    %v766 = vpack.c.b16 %v723, %v722
    %v767 = vpack.c.b16 %v725, %v724
    %v768 = vpack.c.b16 %v727, %v726
    %v769 = vpack.c.b16 %v729, %v728
    %v770 = vpack.c.b16 %v731, %v730
    %v771 = vpack.c.b16 %v733, %v732
    %v772 = vpack.c.b16 %v735, %v734
    %v773 = vpack.c.b16 %v737, %v736
    %v774 = vpack.c.b16 %v739, %v738
    %v775 = vpack.c.b16 %v741, %v740
    %v776 = vpack.c.b16 %v743, %v742
    %v777 = vpack.c.b16 %v745, %v744
    %810 = vmatprep.subr.bf16.mxu0 0
    %811 = vmatpush1.bf16.msra.mxu0 %v746
    %812 = vmatprep.subr.bf16.mxu0 0
    %813 = vmatpush1.bf16.msra.mxu0 %v747
    %814 = vmatprep.subr.bf16.mxu0 0
    %815 = vmatpush1.bf16.msra.mxu0 %v748
    %816 = vmatprep.subr.bf16.mxu0 0
    %817 = vmatpush1.bf16.msra.mxu0 %v749
    %818 = vmatprep.subr.bf16.mxu0 0
    %819 = vmatpush1.bf16.msra.mxu0 %v750
    %820 = vmatprep.subr.bf16.mxu0 0
    %821 = vmatpush1.bf16.msra.mxu0 %v751
    %822 = vmatprep.subr.bf16.mxu0 0
    %823 = vmatpush1.bf16.msra.mxu0 %v752
    %824 = vmatprep.subr.bf16.mxu0 0
    %825 = vmatpush1.bf16.msra.mxu0 %v753
    %826 = vmatprep.subr.bf16.mxu0 0
    %827 = vmatpush1.bf16.msra.mxu0 %v754
    %828 = vmatprep.subr.bf16.mxu0 0
    %829 = vmatpush1.bf16.msra.mxu0 %v755
    %830 = vmatprep.subr.bf16.mxu0 0
    %831 = vmatpush1.bf16.msra.mxu0 %v756
    %832 = vmatprep.subr.bf16.mxu0 0
    %833 = vmatpush1.bf16.msra.mxu0 %v757
    %834 = vmatprep.subr.bf16.mxu0 0
    %835 = vmatpush1.bf16.msra.mxu0 %v758
    %836 = vmatprep.subr.bf16.mxu0 0
    %837 = vmatpush1.bf16.msra.mxu0 %v759
    %838 = vmatprep.subr.bf16.mxu0 0
    %839 = vmatpush1.bf16.msra.mxu0 %v760
    %840 = vmatprep.subr.bf16.mxu0 0
    %841 = vmatpush1.bf16.msra.mxu0 %v761
    %842 = vmatprep.mubr.bf16.mxu0 %v544
    %843 = vmatmul.mubr.bf16.gmra.mrb[0].mxu0 %v543
    %v844 = vpop.f32.mrb[0].mxu0
    %v845 = vadd.f32 %v616, %v844
    %v846 = vpop.f32.mrb[0].mxu0
    %v847 = vpop.f32.mrb[0].mxu0
    %v848 = vadd.f32 %v616, %v847
    %v849 = vpop.f32.mrb[0].mxu0
    %850 = vdwg.mxu0
    %851 = vmatprep.subr.bf16.mxu0 0
    %852 = vmatpush1.bf16.msra.mxu0 %v762
    %853 = vmatprep.subr.bf16.mxu0 0
    %854 = vmatpush1.bf16.msra.mxu0 %v763
    %855 = vmatprep.subr.bf16.mxu0 0
    %856 = vmatpush1.bf16.msra.mxu0 %v764
    %857 = vmatprep.subr.bf16.mxu0 0
    %858 = vmatpush1.bf16.msra.mxu0 %v765
    %859 = vmatprep.subr.bf16.mxu0 0
    %860 = vmatpush1.bf16.msra.mxu0 %v766
    %861 = vmatprep.subr.bf16.mxu0 0
    %862 = vmatpush1.bf16.msra.mxu0 %v767
    %863 = vmatprep.subr.bf16.mxu0 0
    %864 = vmatpush1.bf16.msra.mxu0 %v768
    %865 = vmatprep.subr.bf16.mxu0 0
    %866 = vmatpush1.bf16.msra.mxu0 %v769
    %867 = vmatprep.subr.bf16.mxu0 0
    %868 = vmatpush1.bf16.msra.mxu0 %v770
    %869 = vmatprep.subr.bf16.mxu0 0
    %870 = vmatpush1.bf16.msra.mxu0 %v771
    %871 = vmatprep.subr.bf16.mxu0 0
    %872 = vmatpush1.bf16.msra.mxu0 %v772
    %873 = vmatprep.subr.bf16.mxu0 0
    %874 = vmatpush1.bf16.msra.mxu0 %v773
    %875 = vmatprep.subr.bf16.mxu0 0
    %876 = vmatpush1.bf16.msra.mxu0 %v774
    %877 = vmatprep.subr.bf16.mxu0 0
    %878 = vmatpush1.bf16.msra.mxu0 %v775
    %879 = vmatprep.subr.bf16.mxu0 0
    %880 = vmatpush1.bf16.msra.mxu0 %v776
    %881 = vmatprep.subr.bf16.mxu0 0
    %882 = vmatpush1.bf16.msra.mxu0 %v777
    %883 = vmatprep.mubr.bf16.mxu0 %v546
    %884 = vmatmul.mubr.bf16.gmra.mrb[0].mxu0 %v545
    %v885 = vpop.f32.mrb[0].mxu0
    %v886 = vadd.f32 %v845, %v885
    %v887 = vpop.f32.mrb[0].mxu0
    %v888 = vpop.f32.mrb[0].mxu0
    %v889 = vadd.f32 %v848, %v888
    %v890 = vpop.f32.mrb[0].mxu0
    %891 = vdwg.mxu0
    %v892 = vmax.f32 %v886, 0.0
    %v893 = vmax.f32 %v889, 0.0
    %v894 = vpack.c.bf16 %v893, %v892
    %v895 = vld [vmem:[%s5] sm:$0xff]
    %v896 = vld [vmem:[%s5 + $0x8] sm:$0xff]
    %v897 = vld [vmem:[%s5 + $0x10] sm:$0xff]
    %v898 = vld [vmem:[%s5 + $0x18] sm:$0xff]
    %v899 = vld [vmem:[%s5 + $0x20] sm:$0xff]
    %v900 = vld [vmem:[%s5 + $0x28] sm:$0xff]
    %v901 = vld [vmem:[%s5 + $0x30] sm:$0xff]
    %v902 = vld [vmem:[%s5 + $0x38] sm:$0xff]
    %v903 = vld [vmem:[%s5 + $0x40] sm:$0xff]
    %v904 = vld [vmem:[%s5 + $0x48] sm:$0xff]
    %v905 = vld [vmem:[%s5 + $0x50] sm:$0xff]
    %v906 = vld [vmem:[%s5 + $0x58] sm:$0xff]
    %v907 = vld [vmem:[%s5 + $0x60] sm:$0xff]
    %v908 = vld [vmem:[%s5 + $0x68] sm:$0xff]
    %v909 = vld [vmem:[%s5 + $0x70] sm:$0xff]
    %v910 = vld [vmem:[%s5 + $0x78] sm:$0xff]
    %v911 = vld [vmem:[%s5 + $0x80] sm:$0xff]
    %v912 = vld [vmem:[%s5 + $0x88] sm:$0xff]
    %v913 = vld [vmem:[%s5 + $0x90] sm:$0xff]
    %v914 = vld [vmem:[%s5 + $0x98] sm:$0xff]
    %v915 = vld [vmem:[%s5 + $0xa0] sm:$0xff]
    %v916 = vld [vmem:[%s5 + $0xa8] sm:$0xff]
    %v917 = vld [vmem:[%s5 + $0xb0] sm:$0xff]
    %v918 = vld [vmem:[%s5 + $0xb8] sm:$0xff]
    %v919 = vld [vmem:[%s5 + $0xc0] sm:$0xff]
    %v920 = vld [vmem:[%s5 + $0xc8] sm:$0xff]
    %v921 = vld [vmem:[%s5 + $0xd0] sm:$0xff]
    %v922 = vld [vmem:[%s5 + $0xd8] sm:$0xff]
    %v923 = vld [vmem:[%s5 + $0xe0] sm:$0xff]
    %v924 = vld [vmem:[%s5 + $0xe8] sm:$0xff]
    %v925 = vld [vmem:[%s5 + $0xf0] sm:$0xff]
    %v926 = vld [vmem:[%s5 + $0xf8] sm:$0xff]
    %v927 = vld [vmem:[%s6] sm:$0xf]
    %v929 = vlaneseq
    %v930 = vshrl.u32 %v929, 7
    %v931 = vsub.s32 0, %v930
    %v932 = vrot.slane %v927, %v931
    %v933 = vlaneseq
    %v934 = vshrl.u32 %v933, 7
    %v935 = vsub.s32 1, %v934
    %v936 = vrot.slane %v927, %v935
    %v937 = vlaneseq
    %v938 = vshrl.u32 %v937, 7
    %v939 = vsub.s32 2, %v938
    %v940 = vrot.slane %v927, %v939
    %v941 = vlaneseq
    %v942 = vshrl.u32 %v941, 7
    %v943 = vsub.s32 3, %v942
    %v944 = vrot.slane %v927, %v943
    %v981 = vunpack.c.l.b16 %v895
    %v982 = vunpack.c.h.b16 %v895
    %v983 = vunpack.c.l.b16 %v896
    %v984 = vunpack.c.h.b16 %v896
    %v985 = vunpack.c.l.b16 %v897
    %v986 = vunpack.c.h.b16 %v897
    %v987 = vunpack.c.l.b16 %v898
    %v988 = vunpack.c.h.b16 %v898
    %v989 = vunpack.c.l.b16 %v899
    %v990 = vunpack.c.h.b16 %v899
    %v991 = vunpack.c.l.b16 %v900
    %v992 = vunpack.c.h.b16 %v900
    %v993 = vunpack.c.l.b16 %v901
    %v994 = vunpack.c.h.b16 %v901
    %v995 = vunpack.c.l.b16 %v902
    %v996 = vunpack.c.h.b16 %v902
    %v997 = vunpack.c.l.b16 %v903
    %v998 = vunpack.c.h.b16 %v903
    %v999 = vunpack.c.l.b16 %v904
    %v1000 = vunpack.c.h.b16 %v904
    %v1001 = vunpack.c.l.b16 %v905
    %v1002 = vunpack.c.h.b16 %v905
    %v1003 = vunpack.c.l.b16 %v906
    %v1004 = vunpack.c.h.b16 %v906
    %v1005 = vunpack.c.l.b16 %v907
    %v1006 = vunpack.c.h.b16 %v907
    %v1007 = vunpack.c.l.b16 %v908
    %v1008 = vunpack.c.h.b16 %v908
    %v1009 = vunpack.c.l.b16 %v909
    %v1010 = vunpack.c.h.b16 %v909
    %v1011 = vunpack.c.l.b16 %v910
    %v1012 = vunpack.c.h.b16 %v910
    %v1013 = vunpack.c.l.b16 %v911
    %v1014 = vunpack.c.h.b16 %v911
    %v1015 = vunpack.c.l.b16 %v912
    %v1016 = vunpack.c.h.b16 %v912
    %v1017 = vunpack.c.l.b16 %v913
    %v1018 = vunpack.c.h.b16 %v913
    %v1019 = vunpack.c.l.b16 %v914
    %v1020 = vunpack.c.h.b16 %v914
    %v1021 = vunpack.c.l.b16 %v915
    %v1022 = vunpack.c.h.b16 %v915
    %v1023 = vunpack.c.l.b16 %v916
    %v1024 = vunpack.c.h.b16 %v916
    %v1025 = vunpack.c.l.b16 %v917
    %v1026 = vunpack.c.h.b16 %v917
    %v1027 = vunpack.c.l.b16 %v918
    %v1028 = vunpack.c.h.b16 %v918
    %v1029 = vunpack.c.l.b16 %v919
    %v1030 = vunpack.c.h.b16 %v919
    %v1031 = vunpack.c.l.b16 %v920
    %v1032 = vunpack.c.h.b16 %v920
    %v1033 = vunpack.c.l.b16 %v921
    %v1034 = vunpack.c.h.b16 %v921
    %v1035 = vunpack.c.l.b16 %v922
    %v1036 = vunpack.c.h.b16 %v922
    %v1037 = vunpack.c.l.b16 %v923
    %v1038 = vunpack.c.h.b16 %v923
    %v1039 = vunpack.c.l.b16 %v924
    %v1040 = vunpack.c.h.b16 %v924
    %v1041 = vunpack.c.l.b16 %v925
    %v1042 = vunpack.c.h.b16 %v925
    %v1043 = vunpack.c.l.b16 %v926
    %v1044 = vunpack.c.h.b16 %v926
    %v1045 = vpack.c.b16 %v985, %v981
    %v1046 = vpack.c.b16 %v986, %v982
    %v1047 = vpack.c.b16 %v987, %v983
    %v1048 = vpack.c.b16 %v988, %v984
    %v1049 = vpack.c.b16 %v993, %v989
    %v1050 = vpack.c.b16 %v994, %v990
    %v1051 = vpack.c.b16 %v995, %v991
    %v1052 = vpack.c.b16 %v996, %v992
    %v1053 = vpack.c.b16 %v1001, %v997
    %v1054 = vpack.c.b16 %v1002, %v998
    %v1055 = vpack.c.b16 %v1003, %v999
    %v1056 = vpack.c.b16 %v1004, %v1000
    %v1057 = vpack.c.b16 %v1009, %v1005
    %v1058 = vpack.c.b16 %v1010, %v1006
    %v1059 = vpack.c.b16 %v1011, %v1007
    %v1060 = vpack.c.b16 %v1012, %v1008
    %v1061 = vpack.c.b16 %v1017, %v1013
    %v1062 = vpack.c.b16 %v1018, %v1014
    %v1063 = vpack.c.b16 %v1019, %v1015
    %v1064 = vpack.c.b16 %v1020, %v1016
    %v1065 = vpack.c.b16 %v1025, %v1021
    %v1066 = vpack.c.b16 %v1026, %v1022
    %v1067 = vpack.c.b16 %v1027, %v1023
    %v1068 = vpack.c.b16 %v1028, %v1024
    %v1069 = vpack.c.b16 %v1033, %v1029
    %v1070 = vpack.c.b16 %v1034, %v1030
    %v1071 = vpack.c.b16 %v1035, %v1031
    %v1072 = vpack.c.b16 %v1036, %v1032
    %v1073 = vpack.c.b16 %v1041, %v1037
    %v1074 = vpack.c.b16 %v1042, %v1038
    %v1075 = vpack.c.b16 %v1043, %v1039
    %v1076 = vpack.c.b16 %v1044, %v1040
    %1109 = vmatprep.subr.bf16.mxu0 %v1046
    %1110 = vmatpush1.bf16.msra.mxu0 %v1045
    %1111 = vmatprep.subr.bf16.mxu0 %v1050
    %1112 = vmatpush1.bf16.msra.mxu0 %v1049
    %1113 = vmatprep.subr.bf16.mxu0 %v1054
    %1114 = vmatpush1.bf16.msra.mxu0 %v1053
    %1115 = vmatprep.subr.bf16.mxu0 %v1058
    %1116 = vmatpush1.bf16.msra.mxu0 %v1057
    %1117 = vmatprep.subr.bf16.mxu0 %v1062
    %1118 = vmatpush1.bf16.msra.mxu0 %v1061
    %1119 = vmatprep.subr.bf16.mxu0 %v1066
    %1120 = vmatpush1.bf16.msra.mxu0 %v1065
    %1121 = vmatprep.subr.bf16.mxu0 %v1070
    %1122 = vmatpush1.bf16.msra.mxu0 %v1069
    %1123 = vmatprep.subr.bf16.mxu0 %v1074
    %1124 = vmatpush1.bf16.msra.mxu0 %v1073
    %1125 = vmatprep.subr.bf16.mxu0 0
    %1126 = vmatpush1.bf16.msra.mxu0 0
    %1127 = vmatprep.subr.bf16.mxu0 0
    %1128 = vmatpush1.bf16.msra.mxu0 0
    %1129 = vmatprep.subr.bf16.mxu0 0
    %1130 = vmatpush1.bf16.msra.mxu0 0
    %1131 = vmatprep.subr.bf16.mxu0 0
    %1132 = vmatpush1.bf16.msra.mxu0 0
    %1133 = vmatprep.subr.bf16.mxu0 0
    %1134 = vmatpush1.bf16.msra.mxu0 0
    %1135 = vmatprep.subr.bf16.mxu0 0
    %1136 = vmatpush1.bf16.msra.mxu0 0
    %1137 = vmatprep.subr.bf16.mxu0 0
    %1138 = vmatpush1.bf16.msra.mxu0 0
    %1139 = vmatprep.subr.bf16.mxu0 0
    %1140 = vmatpush1.bf16.msra.mxu0 0
    %1141 = vmatprep.mubr.bf16.mxu0 0
    %1142 = vmatmul.mubr.bf16.gmra.mrb[0].mxu0 %v894
    %v1143 = vpop.f32.mrb[0].mxu0
    %v1144 = vadd.f32 %v932, %v1143
    %v1145 = vpop.f32.mrb[0].mxu0
    %v1146 = vadd.f32 %v936, %v1145
    %v1147 = vpop.f32.mrb[0].mxu0
    %v1148 = vadd.f32 %v932, %v1147
    %v1149 = vpop.f32.mrb[0].mxu0
    %v1150 = vadd.f32 %v936, %v1149
    %1151 = vdwg.mxu0
    %1152 = vmatprep.subr.bf16.mxu0 %v1048
    %1153 = vmatpush1.bf16.msra.mxu0 %v1047
    %1154 = vmatprep.subr.bf16.mxu0 %v1052
    %1155 = vmatpush1.bf16.msra.mxu0 %v1051
    %1156 = vmatprep.subr.bf16.mxu0 %v1056
    %1157 = vmatpush1.bf16.msra.mxu0 %v1055
    %1158 = vmatprep.subr.bf16.mxu0 %v1060
    %1159 = vmatpush1.bf16.msra.mxu0 %v1059
    %1160 = vmatprep.subr.bf16.mxu0 %v1064
    %1161 = vmatpush1.bf16.msra.mxu0 %v1063
    %1162 = vmatprep.subr.bf16.mxu0 %v1068
    %1163 = vmatpush1.bf16.msra.mxu0 %v1067
    %1164 = vmatprep.subr.bf16.mxu0 %v1072
    %1165 = vmatpush1.bf16.msra.mxu0 %v1071
    %1166 = vmatprep.subr.bf16.mxu0 %v1076
    %1167 = vmatpush1.bf16.msra.mxu0 %v1075
    %1168 = vmatprep.subr.bf16.mxu0 0
    %1169 = vmatpush1.bf16.msra.mxu0 0
    %1170 = vmatprep.subr.bf16.mxu0 0
    %1171 = vmatpush1.bf16.msra.mxu0 0
    %1172 = vmatprep.subr.bf16.mxu0 0
    %1173 = vmatpush1.bf16.msra.mxu0 0
    %1174 = vmatprep.subr.bf16.mxu0 0
    %1175 = vmatpush1.bf16.msra.mxu0 0
    %1176 = vmatprep.subr.bf16.mxu0 0
    %1177 = vmatpush1.bf16.msra.mxu0 0
    %1178 = vmatprep.subr.bf16.mxu0 0
    %1179 = vmatpush1.bf16.msra.mxu0 0
    %1180 = vmatprep.subr.bf16.mxu0 0
    %1181 = vmatpush1.bf16.msra.mxu0 0
    %1182 = vmatprep.subr.bf16.mxu0 0
    %1183 = vmatpush1.bf16.msra.mxu0 0
    %1184 = vmatprep.mubr.bf16.mxu0 0
    %1185 = vmatmul.mubr.bf16.gmra.mrb[0].mxu0 %v894
    %v1186 = vpop.f32.mrb[0].mxu0
    %v1187 = vadd.f32 %v940, %v1186
    %v1188 = vpop.f32.mrb[0].mxu0
    %v1189 = vadd.f32 %v944, %v1188
    %v1190 = vpop.f32.mrb[0].mxu0
    %v1191 = vadd.f32 %v940, %v1190
    %v1192 = vpop.f32.mrb[0].mxu0
    %v1193 = vadd.f32 %v944, %v1192
    %1194 = vdwg.mxu0
    %v1195 = vmax.f32 %v1144, 0.0
    %v1196 = vmax.f32 %v1146, 0.0
    %v1197 = vmax.f32 %v1187, 0.0
    %v1198 = vmax.f32 %v1189, 0.0
    %v1199 = vmax.f32 %v1148, 0.0
    %v1200 = vmax.f32 %v1150, 0.0
    %v1201 = vmax.f32 %v1191, 0.0
    %v1202 = vmax.f32 %v1193, 0.0
    %v1203 = vpack.c.bf16 %v1199, %v1195
    %v1204 = vpack.c.bf16 %v1200, %v1196
    %v1205 = vpack.c.bf16 %v1201, %v1197
    %v1206 = vpack.c.bf16 %v1202, %v1198
    %v1207 = vld [vmem:[%s7] sm:$0xff]
    %v1208 = vld [vmem:[%s7 + $0x8] sm:$0xff]
    %v1209 = vld [vmem:[%s7 + $0x10] sm:$0xff]
    %v1210 = vld [vmem:[%s7 + $0x18] sm:$0xff]
    %v1211 = vld [vmem:[%s7 + $0x20] sm:$0xff]
    %v1212 = vld [vmem:[%s7 + $0x28] sm:$0xff]
    %v1213 = vld [vmem:[%s7 + $0x30] sm:$0xff]
    %v1214 = vld [vmem:[%s7 + $0x38] sm:$0xff]
    %v1215 = vld [vmem:[%s7 + $0x40] sm:$0xff]
    %v1216 = vld [vmem:[%s7 + $0x48] sm:$0xff]
    %v1217 = vld [vmem:[%s7 + $0x50] sm:$0xff]
    %v1218 = vld [vmem:[%s7 + $0x58] sm:$0xff]
    %v1219 = vld [vmem:[%s7 + $0x60] sm:$0xff]
    %v1220 = vld [vmem:[%s7 + $0x68] sm:$0xff]
    %v1221 = vld [vmem:[%s7 + $0x70] sm:$0xff]
    %v1222 = vld [vmem:[%s7 + $0x78] sm:$0xff]
    %v1223 = vld [vmem:[%s7 + $0x80] sm:$0xff]
    %v1224 = vld [vmem:[%s7 + $0x88] sm:$0xff]
    %v1225 = vld [vmem:[%s7 + $0x90] sm:$0xff]
    %v1226 = vld [vmem:[%s7 + $0x98] sm:$0xff]
    %v1227 = vld [vmem:[%s7 + $0xa0] sm:$0xff]
    %v1228 = vld [vmem:[%s7 + $0xa8] sm:$0xff]
    %v1229 = vld [vmem:[%s7 + $0xb0] sm:$0xff]
    %v1230 = vld [vmem:[%s7 + $0xb8] sm:$0xff]
    %v1231 = vld [vmem:[%s7 + $0xc0] sm:$0xff]
    %v1232 = vld [vmem:[%s7 + $0xc8] sm:$0xff]
    %v1233 = vld [vmem:[%s7 + $0xd0] sm:$0xff]
    %v1234 = vld [vmem:[%s7 + $0xd8] sm:$0xff]
    %v1235 = vld [vmem:[%s7 + $0xe0] sm:$0xff]
    %v1236 = vld [vmem:[%s7 + $0xe8] sm:$0xff]
    %v1237 = vld [vmem:[%s7 + $0xf0] sm:$0xff]
    %v1238 = vld [vmem:[%s7 + $0xf8] sm:$0xff]
    %v1239 = vld [vmem:[%s7 + $0x100] sm:$0xff]
    %v1240 = vld [vmem:[%s7 + $0x108] sm:$0xff]
    %v1241 = vld [vmem:[%s7 + $0x110] sm:$0xff]
    %v1242 = vld [vmem:[%s7 + $0x118] sm:$0xff]
    %v1243 = vld [vmem:[%s7 + $0x120] sm:$0xff]
    %v1244 = vld [vmem:[%s7 + $0x128] sm:$0xff]
    %v1245 = vld [vmem:[%s7 + $0x130] sm:$0xff]
    %v1246 = vld [vmem:[%s7 + $0x138] sm:$0xff]
    %v1247 = vld [vmem:[%s7 + $0x140] sm:$0xff]
    %v1248 = vld [vmem:[%s7 + $0x148] sm:$0xff]
    %v1249 = vld [vmem:[%s7 + $0x150] sm:$0xff]
    %v1250 = vld [vmem:[%s7 + $0x158] sm:$0xff]
    %v1251 = vld [vmem:[%s7 + $0x160] sm:$0xff]
    %v1252 = vld [vmem:[%s7 + $0x168] sm:$0xff]
    %v1253 = vld [vmem:[%s7 + $0x170] sm:$0xff]
    %v1254 = vld [vmem:[%s7 + $0x178] sm:$0xff]
    %v1255 = vld [vmem:[%s7 + $0x180] sm:$0xff]
    %v1256 = vld [vmem:[%s7 + $0x188] sm:$0xff]
    %v1257 = vld [vmem:[%s7 + $0x190] sm:$0xff]
    %v1258 = vld [vmem:[%s7 + $0x198] sm:$0xff]
    %v1259 = vld [vmem:[%s7 + $0x1a0] sm:$0xff]
    %v1260 = vld [vmem:[%s7 + $0x1a8] sm:$0xff]
    %v1261 = vld [vmem:[%s7 + $0x1b0] sm:$0xff]
    %v1262 = vld [vmem:[%s7 + $0x1b8] sm:$0xff]
    %v1263 = vld [vmem:[%s7 + $0x1c0] sm:$0xff]
    %v1264 = vld [vmem:[%s7 + $0x1c8] sm:$0xff]
    %v1265 = vld [vmem:[%s7 + $0x1d0] sm:$0xff]
    %v1266 = vld [vmem:[%s7 + $0x1d8] sm:$0xff]
    %v1267 = vld [vmem:[%s7 + $0x1e0] sm:$0xff]
    %v1268 = vld [vmem:[%s7 + $0x1e8] sm:$0xff]
    %v1269 = vld [vmem:[%s7 + $0x1f0] sm:$0xff]
    %v1270 = vld [vmem:[%s7 + $0x1f8] sm:$0xff]
    %v1271 = vld [vmem:[%s8] sm:$0x3]
    %v1273 = vlaneseq
    %v1274 = vshrl.u32 %v1273, 7
    %v1275 = vsub.s32 0, %v1274
    %v1276 = vrot.slane %v1271, %v1275
    %v1277 = vlaneseq
    %v1278 = vshrl.u32 %v1277, 7
    %v1279 = vsub.s32 1, %v1278
    %v1280 = vrot.slane %v1271, %v1279
    %v1347 = vunpack.c.l.b16 %v1207
    %v1348 = vunpack.c.h.b16 %v1207
    %v1349 = vunpack.c.l.b16 %v1208
    %v1350 = vunpack.c.h.b16 %v1208
    %v1351 = vunpack.c.l.b16 %v1209
    %v1352 = vunpack.c.h.b16 %v1209
    %v1353 = vunpack.c.l.b16 %v1210
    %v1354 = vunpack.c.h.b16 %v1210
    %v1355 = vunpack.c.l.b16 %v1211
    %v1356 = vunpack.c.h.b16 %v1211
    %v1357 = vunpack.c.l.b16 %v1212
    %v1358 = vunpack.c.h.b16 %v1212
    %v1359 = vunpack.c.l.b16 %v1213
    %v1360 = vunpack.c.h.b16 %v1213
    %v1361 = vunpack.c.l.b16 %v1214
    %v1362 = vunpack.c.h.b16 %v1214
    %v1363 = vunpack.c.l.b16 %v1215
    %v1364 = vunpack.c.h.b16 %v1215
    %v1365 = vunpack.c.l.b16 %v1216
    %v1366 = vunpack.c.h.b16 %v1216
    %v1367 = vunpack.c.l.b16 %v1217
    %v1368 = vunpack.c.h.b16 %v1217
    %v1369 = vunpack.c.l.b16 %v1218
    %v1370 = vunpack.c.h.b16 %v1218
    %v1371 = vunpack.c.l.b16 %v1219
    %v1372 = vunpack.c.h.b16 %v1219
    %v1373 = vunpack.c.l.b16 %v1220
    %v1374 = vunpack.c.h.b16 %v1220
    %v1375 = vunpack.c.l.b16 %v1221
    %v1376 = vunpack.c.h.b16 %v1221
    %v1377 = vunpack.c.l.b16 %v1222
    %v1378 = vunpack.c.h.b16 %v1222
    %v1379 = vunpack.c.l.b16 %v1223
    %v1380 = vunpack.c.h.b16 %v1223
    %v1381 = vunpack.c.l.b16 %v1224
    %v1382 = vunpack.c.h.b16 %v1224
    %v1383 = vunpack.c.l.b16 %v1225
    %v1384 = vunpack.c.h.b16 %v1225
    %v1385 = vunpack.c.l.b16 %v1226
    %v1386 = vunpack.c.h.b16 %v1226
    %v1387 = vunpack.c.l.b16 %v1227
    %v1388 = vunpack.c.h.b16 %v1227
    %v1389 = vunpack.c.l.b16 %v1228
    %v1390 = vunpack.c.h.b16 %v1228
    %v1391 = vunpack.c.l.b16 %v1229
    %v1392 = vunpack.c.h.b16 %v1229
    %v1393 = vunpack.c.l.b16 %v1230
    %v1394 = vunpack.c.h.b16 %v1230
    %v1395 = vunpack.c.l.b16 %v1231
    %v1396 = vunpack.c.h.b16 %v1231
    %v1397 = vunpack.c.l.b16 %v1232
    %v1398 = vunpack.c.h.b16 %v1232
    %v1399 = vunpack.c.l.b16 %v1233
    %v1400 = vunpack.c.h.b16 %v1233
    %v1401 = vunpack.c.l.b16 %v1234
    %v1402 = vunpack.c.h.b16 %v1234
    %v1403 = vunpack.c.l.b16 %v1235
    %v1404 = vunpack.c.h.b16 %v1235
    %v1405 = vunpack.c.l.b16 %v1236
    %v1406 = vunpack.c.h.b16 %v1236
    %v1407 = vunpack.c.l.b16 %v1237
    %v1408 = vunpack.c.h.b16 %v1237
    %v1409 = vunpack.c.l.b16 %v1238
    %v1410 = vunpack.c.h.b16 %v1238
    %v1411 = vunpack.c.l.b16 %v1239
    %v1412 = vunpack.c.h.b16 %v1239
    %v1413 = vunpack.c.l.b16 %v1240
    %v1414 = vunpack.c.h.b16 %v1240
    %v1415 = vunpack.c.l.b16 %v1241
    %v1416 = vunpack.c.h.b16 %v1241
    %v1417 = vunpack.c.l.b16 %v1242
    %v1418 = vunpack.c.h.b16 %v1242
    %v1419 = vunpack.c.l.b16 %v1243
    %v1420 = vunpack.c.h.b16 %v1243
    %v1421 = vunpack.c.l.b16 %v1244
    %v1422 = vunpack.c.h.b16 %v1244
    %v1423 = vunpack.c.l.b16 %v1245
    %v1424 = vunpack.c.h.b16 %v1245
    %v1425 = vunpack.c.l.b16 %v1246
    %v1426 = vunpack.c.h.b16 %v1246
    %v1427 = vunpack.c.l.b16 %v1247
    %v1428 = vunpack.c.h.b16 %v1247
    %v1429 = vunpack.c.l.b16 %v1248
    %v1430 = vunpack.c.h.b16 %v1248
    %v1431 = vunpack.c.l.b16 %v1249
    %v1432 = vunpack.c.h.b16 %v1249
    %v1433 = vunpack.c.l.b16 %v1250
    %v1434 = vunpack.c.h.b16 %v1250
    %v1435 = vunpack.c.l.b16 %v1251
    %v1436 = vunpack.c.h.b16 %v1251
    %v1437 = vunpack.c.l.b16 %v1252
    %v1438 = vunpack.c.h.b16 %v1252
    %v1439 = vunpack.c.l.b16 %v1253
    %v1440 = vunpack.c.h.b16 %v1253
    %v1441 = vunpack.c.l.b16 %v1254
    %v1442 = vunpack.c.h.b16 %v1254
    %v1443 = vunpack.c.l.b16 %v1255
    %v1444 = vunpack.c.h.b16 %v1255
    %v1445 = vunpack.c.l.b16 %v1256
    %v1446 = vunpack.c.h.b16 %v1256
    %v1447 = vunpack.c.l.b16 %v1257
    %v1448 = vunpack.c.h.b16 %v1257
    %v1449 = vunpack.c.l.b16 %v1258
    %v1450 = vunpack.c.h.b16 %v1258
    %v1451 = vunpack.c.l.b16 %v1259
    %v1452 = vunpack.c.h.b16 %v1259
    %v1453 = vunpack.c.l.b16 %v1260
    %v1454 = vunpack.c.h.b16 %v1260
    %v1455 = vunpack.c.l.b16 %v1261
    %v1456 = vunpack.c.h.b16 %v1261
    %v1457 = vunpack.c.l.b16 %v1262
    %v1458 = vunpack.c.h.b16 %v1262
    %v1459 = vunpack.c.l.b16 %v1263
    %v1460 = vunpack.c.h.b16 %v1263
    %v1461 = vunpack.c.l.b16 %v1264
    %v1462 = vunpack.c.h.b16 %v1264
    %v1463 = vunpack.c.l.b16 %v1265
    %v1464 = vunpack.c.h.b16 %v1265
    %v1465 = vunpack.c.l.b16 %v1266
    %v1466 = vunpack.c.h.b16 %v1266
    %v1467 = vunpack.c.l.b16 %v1267
    %v1468 = vunpack.c.h.b16 %v1267
    %v1469 = vunpack.c.l.b16 %v1268
    %v1470 = vunpack.c.h.b16 %v1268
    %v1471 = vunpack.c.l.b16 %v1269
    %v1472 = vunpack.c.h.b16 %v1269
    %v1473 = vunpack.c.l.b16 %v1270
    %v1474 = vunpack.c.h.b16 %v1270
    %v1475 = vpack.c.b16 %v1349, %v1347
    %v1476 = vpack.c.b16 %v1350, %v1348
    %v1477 = vpack.c.b16 %v1353, %v1351
    %v1478 = vpack.c.b16 %v1354, %v1352
    %v1479 = vpack.c.b16 %v1357, %v1355
    %v1480 = vpack.c.b16 %v1358, %v1356
    %v1481 = vpack.c.b16 %v1361, %v1359
    %v1482 = vpack.c.b16 %v1362, %v1360
    %v1483 = vpack.c.b16 %v1365, %v1363
    %v1484 = vpack.c.b16 %v1366, %v1364
    %v1485 = vpack.c.b16 %v1369, %v1367
    %v1486 = vpack.c.b16 %v1370, %v1368
    %v1487 = vpack.c.b16 %v1373, %v1371
    %v1488 = vpack.c.b16 %v1374, %v1372
    %v1489 = vpack.c.b16 %v1377, %v1375
    %v1490 = vpack.c.b16 %v1378, %v1376
    %v1491 = vpack.c.b16 %v1381, %v1379
    %v1492 = vpack.c.b16 %v1382, %v1380
    %v1493 = vpack.c.b16 %v1385, %v1383
    %v1494 = vpack.c.b16 %v1386, %v1384
    %v1495 = vpack.c.b16 %v1389, %v1387
    %v1496 = vpack.c.b16 %v1390, %v1388
    %v1497 = vpack.c.b16 %v1393, %v1391
    %v1498 = vpack.c.b16 %v1394, %v1392
    %v1499 = vpack.c.b16 %v1397, %v1395
    %v1500 = vpack.c.b16 %v1398, %v1396
    %v1501 = vpack.c.b16 %v1401, %v1399
    %v1502 = vpack.c.b16 %v1402, %v1400
    %v1503 = vpack.c.b16 %v1405, %v1403
    %v1504 = vpack.c.b16 %v1406, %v1404
    %v1505 = vpack.c.b16 %v1409, %v1407
    %v1506 = vpack.c.b16 %v1410, %v1408
    %v1507 = vpack.c.b16 %v1413, %v1411
    %v1508 = vpack.c.b16 %v1414, %v1412
    %v1509 = vpack.c.b16 %v1417, %v1415
    %v1510 = vpack.c.b16 %v1418, %v1416
    %v1511 = vpack.c.b16 %v1421, %v1419
    %v1512 = vpack.c.b16 %v1422, %v1420
    %v1513 = vpack.c.b16 %v1425, %v1423
    %v1514 = vpack.c.b16 %v1426, %v1424
    %v1515 = vpack.c.b16 %v1429, %v1427
    %v1516 = vpack.c.b16 %v1430, %v1428
    %v1517 = vpack.c.b16 %v1433, %v1431
    %v1518 = vpack.c.b16 %v1434, %v1432
    %v1519 = vpack.c.b16 %v1437, %v1435
    %v1520 = vpack.c.b16 %v1438, %v1436
    %v1521 = vpack.c.b16 %v1441, %v1439
    %v1522 = vpack.c.b16 %v1442, %v1440
    %v1523 = vpack.c.b16 %v1445, %v1443
    %v1524 = vpack.c.b16 %v1446, %v1444
    %v1525 = vpack.c.b16 %v1449, %v1447
    %v1526 = vpack.c.b16 %v1450, %v1448
    %v1527 = vpack.c.b16 %v1453, %v1451
    %v1528 = vpack.c.b16 %v1454, %v1452
    %v1529 = vpack.c.b16 %v1457, %v1455
    %v1530 = vpack.c.b16 %v1458, %v1456
    %v1531 = vpack.c.b16 %v1461, %v1459
    %v1532 = vpack.c.b16 %v1462, %v1460
    %v1533 = vpack.c.b16 %v1465, %v1463
    %v1534 = vpack.c.b16 %v1466, %v1464
    %v1535 = vpack.c.b16 %v1469, %v1467
    %v1536 = vpack.c.b16 %v1470, %v1468
    %v1537 = vpack.c.b16 %v1473, %v1471
    %v1538 = vpack.c.b16 %v1474, %v1472
    %1603 = vmatprep.subr.bf16.mxu0 %v1476
    %1604 = vmatpush1.bf16.msra.mxu0 %v1475
    %1605 = vmatprep.subr.bf16.mxu0 %v1478
    %1606 = vmatpush1.bf16.msra.mxu0 %v1477
    %1607 = vmatprep.subr.bf16.mxu0 %v1480
    %1608 = vmatpush1.bf16.msra.mxu0 %v1479
    %1609 = vmatprep.subr.bf16.mxu0 %v1482
    %1610 = vmatpush1.bf16.msra.mxu0 %v1481
    %1611 = vmatprep.subr.bf16.mxu0 %v1484
    %1612 = vmatpush1.bf16.msra.mxu0 %v1483
    %1613 = vmatprep.subr.bf16.mxu0 %v1486
    %1614 = vmatpush1.bf16.msra.mxu0 %v1485
    %1615 = vmatprep.subr.bf16.mxu0 %v1488
    %1616 = vmatpush1.bf16.msra.mxu0 %v1487
    %1617 = vmatprep.subr.bf16.mxu0 %v1490
    %1618 = vmatpush1.bf16.msra.mxu0 %v1489
    %1619 = vmatprep.subr.bf16.mxu0 %v1492
    %1620 = vmatpush1.bf16.msra.mxu0 %v1491
    %1621 = vmatprep.subr.bf16.mxu0 %v1494
    %1622 = vmatpush1.bf16.msra.mxu0 %v1493
    %1623 = vmatprep.subr.bf16.mxu0 %v1496
    %1624 = vmatpush1.bf16.msra.mxu0 %v1495
    %1625 = vmatprep.subr.bf16.mxu0 %v1498
    %1626 = vmatpush1.bf16.msra.mxu0 %v1497
    %1627 = vmatprep.subr.bf16.mxu0 %v1500
    %1628 = vmatpush1.bf16.msra.mxu0 %v1499
    %1629 = vmatprep.subr.bf16.mxu0 %v1502
    %1630 = vmatpush1.bf16.msra.mxu0 %v1501
    %1631 = vmatprep.subr.bf16.mxu0 %v1504
    %1632 = vmatpush1.bf16.msra.mxu0 %v1503
    %1633 = vmatprep.subr.bf16.mxu0 %v1506
    %1634 = vmatpush1.bf16.msra.mxu0 %v1505
    %1635 = vmatprep.mubr.bf16.mxu0 %v1204
    %1636 = vmatmul.mubr.bf16.gmra.mrb[0].mxu0 %v1203
    %v1637 = vpop.f32.mrb[0].mxu0
    %v1638 = vadd.f32 %v1276, %v1637
    %v1639 = vpop.f32.mrb[0].mxu0
    %v1640 = vadd.f32 %v1280, %v1639
    %v1641 = vpop.f32.mrb[0].mxu0
    %v1642 = vadd.f32 %v1276, %v1641
    %v1643 = vpop.f32.mrb[0].mxu0
    %v1644 = vadd.f32 %v1280, %v1643
    %1645 = vdwg.mxu0
    %1646 = vmatprep.subr.bf16.mxu0 %v1508
    %1647 = vmatpush1.bf16.msra.mxu0 %v1507
    %1648 = vmatprep.subr.bf16.mxu0 %v1510
    %1649 = vmatpush1.bf16.msra.mxu0 %v1509
    %1650 = vmatprep.subr.bf16.mxu0 %v1512
    %1651 = vmatpush1.bf16.msra.mxu0 %v1511
    %1652 = vmatprep.subr.bf16.mxu0 %v1514
    %1653 = vmatpush1.bf16.msra.mxu0 %v1513
    %1654 = vmatprep.subr.bf16.mxu0 %v1516
    %1655 = vmatpush1.bf16.msra.mxu0 %v1515
    %1656 = vmatprep.subr.bf16.mxu0 %v1518
    %1657 = vmatpush1.bf16.msra.mxu0 %v1517
    %1658 = vmatprep.subr.bf16.mxu0 %v1520
    %1659 = vmatpush1.bf16.msra.mxu0 %v1519
    %1660 = vmatprep.subr.bf16.mxu0 %v1522
    %1661 = vmatpush1.bf16.msra.mxu0 %v1521
    %1662 = vmatprep.subr.bf16.mxu0 %v1524
    %1663 = vmatpush1.bf16.msra.mxu0 %v1523
    %1664 = vmatprep.subr.bf16.mxu0 %v1526
    %1665 = vmatpush1.bf16.msra.mxu0 %v1525
    %1666 = vmatprep.subr.bf16.mxu0 %v1528
    %1667 = vmatpush1.bf16.msra.mxu0 %v1527
    %1668 = vmatprep.subr.bf16.mxu0 %v1530
    %1669 = vmatpush1.bf16.msra.mxu0 %v1529
    %1670 = vmatprep.subr.bf16.mxu0 %v1532
    %1671 = vmatpush1.bf16.msra.mxu0 %v1531
    %1672 = vmatprep.subr.bf16.mxu0 %v1534
    %1673 = vmatpush1.bf16.msra.mxu0 %v1533
    %1674 = vmatprep.subr.bf16.mxu0 %v1536
    %1675 = vmatpush1.bf16.msra.mxu0 %v1535
    %1676 = vmatprep.subr.bf16.mxu0 %v1538
    %1677 = vmatpush1.bf16.msra.mxu0 %v1537
    %1678 = vmatprep.mubr.bf16.mxu0 %v1206
    %1679 = vmatmul.mubr.bf16.gmra.mrb[0].mxu0 %v1205
    %v1680 = vpop.f32.mrb[0].mxu0
    %v1681 = vadd.f32 %v1638, %v1680
    %v1682 = vpop.f32.mrb[0].mxu0
    %v1683 = vadd.f32 %v1640, %v1682
    %v1684 = vpop.f32.mrb[0].mxu0
    %v1685 = vadd.f32 %v1642, %v1684
    %v1686 = vpop.f32.mrb[0].mxu0
    %v1687 = vadd.f32 %v1644, %v1686
    %1688 = vdwg.mxu0
    %v1689 = vmax.f32 %v1681, 0.0
    %v1690 = vmax.f32 %v1683, 0.0
    %v1691 = vmax.f32 %v1685, 0.0
    %v1692 = vmax.f32 %v1687, 0.0
    %v1693 = vpack.c.bf16 %v1691, %v1689
    %v1694 = vpack.c.bf16 %v1692, %v1690
    %v1696 = vunpack.c.l.b16 %v894
    %v1697 = vunpack.c.h.b16 %v894
    %v1698 = vpack.c.b16 %v1696, %v1696
    %v1699 = vpack.c.b16 %v1697, %v1697
    %1702 = vst [vmem:[#allocation2] sm:$0xf] %v1698
    %1703 = vst [vmem:[#allocation2 + $0x4] sm:$0xf] %v1699
    %v1706 = vunpack.c.l.b16 %v1693
    %v1707 = vunpack.c.l.b16 %v1694
    %v1708 = vunpack.c.h.b16 %v1693
    %v1709 = vunpack.c.h.b16 %v1694
    %v1710 = vpack.c.b16 %v1707, %v1706
    %v1711 = vpack.c.b16 %v1709, %v1708
    %1714 = vst [vmem:[#allocation4] sm:$0xff] %v1710
    %1715 = vst [vmem:[#allocation4 + $0x8] sm:$0xff] %v1711
    // Predicated region
    $region38: #{_autoencoder_impl.1} parent=1 // pred_check
      _
    $region39: #{_autoencoder_impl.1} parent=1 // pred_check_branch
      %1717 = sbr.rel (0) target = $region41
    $region40: #{_autoencoder_impl.1} parent=1 // pred_region
      %s1719 = ssub.s32 128, 128
      %1720 = vsyncadd [#allocation3], %s1719
      %s1721 = sshll.u32 [#allocation2], 4
      %s1722 = int_to_ptr.vmem [resolvable:$true] %s1721
      %1727 = dma.vmem_to_hbm [thread:$0]  %s1722, 128, %s9, [#allocation3], 64, 64, 4
    $region41: #{_autoencoder_impl.1} parent=1 // pred_fallthru
      _
    // Predicated region
    $region42: #{_autoencoder_impl.1} parent=1 // pred_check
      _
    $region43: #{_autoencoder_impl.1} parent=1 // pred_check_branch
      %1729 = sbr.rel (0) target = $region45
    $region44: #{_autoencoder_impl.1} parent=1 // pred_region
      %s1731 = ssub.s32 256, 256
      %1732 = vsyncadd [#allocation5], %s1731
      %s1733 = sshll.u32 [#allocation4], 4
      %s1734 = int_to_ptr.vmem [resolvable:$true] %s1733
      %1739 = dma.vmem_to_hbm [thread:$0]  %s1734, 256, %s10, [#allocation5], 128, 128, 8
    $region45: #{_autoencoder_impl.1} parent=1 // pred_fallthru
      _
    // Predicated region
    $region46: #{_autoencoder_impl.1} parent=1 // pred_check
      _
    $region47: #{_autoencoder_impl.1} parent=1 // pred_check_branch
      %1741 = sbr.rel (0) target = $region49
    $region48: #{_autoencoder_impl.1} parent=1 // pred_region
      %1742 = dma.done [#allocation3], 128
    $region49: #{_autoencoder_impl.1} parent=1 // pred_fallthru
      _
    // Predicated region
    $region50: #{_autoencoder_impl.1} parent=1 // pred_check
      _
    $region51: #{_autoencoder_impl.1} parent=1 // pred_check_branch
      %1744 = sbr.rel (0) target = $region53
    $region52: #{_autoencoder_impl.1} parent=1 // pred_region
      %1745 = dma.done [#allocation5], 256
    $region53: #{_autoencoder_impl.1} parent=1 // pred_fallthru
      _
    %1746 = vsyncpa [#allocation3], 1
    %1747 = vsyncpa [#allocation5], 1

</llo_original>
